<compile_context>
chip_gen: v7x
topology: tpu7x:2x2x1
jax: 0.10.0
libtpu: 0.0.40
codegen_flags: <defaults>
</compile_context>

<pallas_src>
import jax
import jax.numpy as jnp
from jax.experimental import pallas as pl
from jax.experimental.pallas import tpu as pltpu

EPS = 1e-3  # matches BatchNorm2d(eps=0.001)


def conv_bn_kernel(x_ref, w_ref, gb_ref, o_ref):
    # Cast to bf16 *inside* the kernel (cheap VPU cast on already-resident
    # VMEM data); MXU matmul with f32 accumulation.
    x = x_ref[...].astype(jnp.bfloat16)          # (Cin, rows)
    w = w_ref[...].astype(jnp.bfloat16)          # (cout_blk, Cin)
    y = jnp.dot(w, x, preferred_element_type=jnp.float32)   # (cout_blk, rows)

    # BatchNorm2d (training mode): per-channel batch stats over all rows
    # (= N*H*W, the lane axis). Two-pass variance (centered) to avoid the
    # E[y^2]-E[y]^2 cancellation issue; biased variance as PyTorch uses for
    # normalization.
    rows = y.shape[1]
    inv_rows = 1.0 / rows
    mean = jnp.sum(y, axis=1, keepdims=True) * inv_rows        # (cout_blk, 1)
    centered = y - mean
    var = jnp.sum(centered * centered, axis=1, keepdims=True) * inv_rows
    inv = jax.lax.rsqrt(var + EPS)

    gamma = gb_ref[:, 0:1]                                     # (cout_blk, 1)
    beta = gb_ref[:, 1:2]                                      # (cout_blk, 1)
    o_ref[...] = centered * (gamma * inv) + beta
    # TODO(synk): running_mean/running_var momentum-update buffers (module
    # side effects) are not part of the returned value and are not emitted.


def _default_cout_blocks(cout):
    """2-way Cout split only on v7x (2 TensorCores/chip); 1 elsewhere."""
    try:
        kind = jax.devices()[0].device_kind.lower()
    except Exception:
        return 1
    if "v7" in kind and cout % 2 == 0 and (cout // 2) % 8 == 0:
        return 2
    return 1


def conv2d_1x1_batchnorm(x_nchw, weight_oihw, gamma, beta, *, num_cout_blocks=None):
    N, Cin, H, W = x_nchw.shape
    Cout = weight_oihw.shape[0]
    rows = N * H * W

    # Transpose-free path for N=1 (the module's case).
    if N == 1:
        x2d = x_nchw.reshape(Cin, rows)
    else:
        x2d = jnp.moveaxis(x_nchw.reshape(N, Cin, H * W), 1, 0).reshape(Cin, rows)

    w2d = weight_oihw.reshape(Cout, Cin)           # keep caller's dtype (f32 or bf16)
    # gamma / beta packed into one (Cout, 2) f32 input: col 0 = gamma, col 1 = beta.
    gb = jnp.stack([gamma.astype(jnp.float32), beta.astype(jnp.float32)], axis=1)

    if num_cout_blocks is None:
        num_cout_blocks = _default_cout_blocks(Cout)

    cost = pl.CostEstimate(
        flops=2 * rows * Cin * Cout + 6 * rows * Cout,
        transcendentals=Cout,
        bytes_accessed=(x2d.size * x2d.dtype.itemsize
                        + w2d.size * w2d.dtype.itemsize
                        + rows * Cout * 4
                        + 2 * Cout * 4),
    )
    cparams_kwargs = dict(vmem_limit_bytes=32 * 1024 * 1024)
    out_shape = jax.ShapeDtypeStruct((Cout, rows), jnp.float32)

    if num_cout_blocks <= 1:
        # Gridless single shot (v5e / v6e): whole problem is <1 MB of VMEM.
        out2d = pl.pallas_call(
            conv_bn_kernel,
            out_shape=out_shape,
            in_specs=[pl.BlockSpec(memory_space=pltpu.MemorySpace.VMEM)] * 3,
            out_specs=pl.BlockSpec(memory_space=pltpu.MemorySpace.VMEM),
            compiler_params=pltpu.CompilerParams(**cparams_kwargs),
            cost_estimate=cost,
        )(x2d, w2d, gb)
    else:
        # v7x: split Cout across both TensorCores. BN stats are per-channel,
        # so each Cout block is fully independent (no cross-core reduction).
        cb = Cout // num_cout_blocks
        out2d = pl.pallas_call(
            conv_bn_kernel,
            out_shape=out_shape,
            grid=(num_cout_blocks,),
            in_specs=[
                pl.BlockSpec((Cin, rows), lambda i: (0, 0)),   # x: whole
                pl.BlockSpec((cb, Cin), lambda i: (i, 0)),     # weight slice
                pl.BlockSpec((cb, 2), lambda i: (i, 0)),       # gamma/beta slice
            ],
            out_specs=pl.BlockSpec((cb, rows), lambda i: (i, 0)),
            compiler_params=pltpu.CompilerParams(
                dimension_semantics=("parallel",), **cparams_kwargs),
            cost_estimate=cost,
        )(x2d, w2d, gb)

    if N == 1:
        return out2d.reshape(1, Cout, H, W)
    return jnp.moveaxis(out2d.reshape(Cout, N, H * W), 0, 1).reshape(N, Cout, H, W)


if __name__ == "__main__":
    key = jax.random.PRNGKey(0)
    kx, kw, kg, kb = jax.random.split(key, 4)

    # Shapes fixed by the module: x364 is (1, 1056, 14, 14), conv 1056 -> 176.
    N, Cin, H, W, Cout = 1, 1056, 14, 14, 176

    x = jax.random.normal(kx, (N, Cin, H, W), dtype=jnp.float32)

    # Conv2d weight (Cout, Cin, 1, 1), no bias.  Cast to bf16 ONCE at
    # "parameter init" time (amortized; the per-call path never re-casts it).
    weight = 0.02 * jax.random.normal(kw, (Cout, Cin, 1, 1), dtype=jnp.float32)
    weight_bf16 = weight.astype(jnp.bfloat16)

    # BatchNorm2d affine params (perturbed so the affine path is exercised).
    gamma = jnp.ones((Cout,), jnp.float32) + 0.1 * jax.random.normal(
        kg, (Cout,), dtype=jnp.float32)
    beta = 0.1 * jax.random.normal(kb, (Cout,), dtype=jnp.float32)

    out = conv2d_1x1_batchnorm(x, weight_bf16, gamma, beta)
    jax.block_until_ready(out)
    assert out.shape == (N, Cout, H, W)
    assert bool(jnp.all(jnp.isfinite(out)))
    print("KERNEL_OK")
</pallas_src>

<mosaic_0001>
module attributes {stable_mosaic.version = 11 : i64} {
  func.func @conv_bn_kernel(%arg0: memref<1056x196xf32, #tpu.memory_space<vmem>>, %arg1: memref<176x1056xbf16, #tpu.memory_space<vmem>>, %arg2: memref<176x2xf32, #tpu.memory_space<vmem>>, %arg3: memref<176x196xf32, #tpu.memory_space<vmem>>) attributes {dimension_semantics = [], scalar_prefetch = 0 : i64, scratch_operands = 0 : i64, tpu.core_type = #tpu.core_type<tc>} {
    %c0 = arith.constant 0 : index
    %c0_0 = arith.constant 0 : index
    %0 = vector.load %arg0[%c0, %c0_0] : memref<1056x196xf32, #tpu.memory_space<vmem>>, vector<1056x196xf32>
    %1 = arith.truncf %0 : vector<1056x196xf32> to vector<1056x196xbf16>
    %c0_1 = arith.constant 0 : index
    %c0_2 = arith.constant 0 : index
    %2 = vector.load %arg1[%c0_1, %c0_2] : memref<176x1056xbf16, #tpu.memory_space<vmem>>, vector<176x1056xbf16>
    %cst = arith.constant dense<0.000000e+00> : vector<176x196xf32>
    %3 = tpu.matmul %2, %1, %cst {dimension_numbers = #tpu.dot_dimension_numbers<[1], [0], [0], [1], [0, 0, 1, 1], [], []>} : vector<176x1056xbf16>, vector<1056x196xbf16>, vector<176x196xf32> -> vector<176x196xf32>
    %cst_3 = arith.constant dense<0.000000e+00> : vector<176xf32>
    %4 = vector.multi_reduction <add>, %3, %cst_3 [1] : vector<176x196xf32> to vector<176xf32>
    %5 = vector.shape_cast %4 : vector<176xf32> to vector<176x1xf32>
    %cst_4 = arith.constant 0.00510204071 : f32
    %6 = vector.broadcast %cst_4 : f32 to vector<176x1xf32>
    %7 = arith.mulf %5, %6 : vector<176x1xf32>
    %8 = vector.broadcast %7 : vector<176x1xf32> to vector<176x196xf32>
    %9 = arith.subf %3, %8 : vector<176x196xf32>
    %10 = arith.mulf %9, %9 : vector<176x196xf32>
    %cst_5 = arith.constant dense<0.000000e+00> : vector<176xf32>
    %11 = vector.multi_reduction <add>, %10, %cst_5 [1] : vector<176x196xf32> to vector<176xf32>
    %12 = vector.shape_cast %11 : vector<176xf32> to vector<176x1xf32>
    %cst_6 = arith.constant 0.00510204071 : f32
    %13 = vector.broadcast %cst_6 : f32 to vector<176x1xf32>
    %14 = arith.mulf %12, %13 : vector<176x1xf32>
    %cst_7 = arith.constant 1.000000e-03 : f32
    %15 = vector.broadcast %cst_7 : f32 to vector<176x1xf32>
    %16 = arith.addf %14, %15 : vector<176x1xf32>
    %17 = math.rsqrt %16 : vector<176x1xf32>
    %c0_8 = arith.constant 0 : index
    %c0_9 = arith.constant 0 : index
    %18 = vector.load %arg2[%c0_8, %c0_9] : memref<176x2xf32, #tpu.memory_space<vmem>>, vector<176x1xf32>
    %c0_10 = arith.constant 0 : index
    %c1 = arith.constant 1 : index
    %19 = vector.load %arg2[%c0_10, %c1] : memref<176x2xf32, #tpu.memory_space<vmem>>, vector<176x1xf32>
    %20 = arith.mulf %18, %17 : vector<176x1xf32>
    %21 = vector.broadcast %20 : vector<176x1xf32> to vector<176x196xf32>
    %22 = arith.mulf %9, %21 : vector<176x196xf32>
    %23 = vector.broadcast %19 : vector<176x1xf32> to vector<176x196xf32>
    %24 = arith.addf %22, %23 : vector<176x196xf32>
    %c0_11 = arith.constant 0 : index
    %c0_12 = arith.constant 0 : index
    %25 = vector.load %arg3[%c0_11, %c0_12] : memref<176x196xf32, #tpu.memory_space<vmem>>, vector<176x196xf32>
    tpu.vector_store %arg3[%c0_11, %c0_12], %24 {strides = array<i32>} : memref<176x196xf32, #tpu.memory_space<vmem>>, vector<176x196xf32>,
    return
  }
}

</mosaic_0001>

<llo_original>
// kernel: tpu_custom_call.1
$region0: #{tpu_custom_call.1}
  #allocation0 [shape = 'u32[]', space=smem, size = 0x4, offset = 0x4, fixed_abs, tag = 'smem constant byte address 0x4 - core index']
  #allocation1 [shape = 'u32[144,128]{1,0:T(1,128)}', space=vmem, size = 0x12000, scoped, tag = 'internal scratch']
  %s0 = inlined_call_operand.vmem [shape: f32[1056,196], index: 0, kind: input, shape index: {}]
  %s1 = inlined_call_operand.vmem [shape: bf16[176,1056], index: 1, kind: input, shape index: {}]
  %s2 = inlined_call_operand.vmem [shape: f32[176,2], index: 2, kind: input, shape index: {}]
  %s3 = inlined_call_operand.hbm [shape: f32[176,196], index: 3, kind: output, shape index: {}]
  %s4 = sld [smem:[#allocation0]]
  $region22: #{tpu_custom_call.1} parent=0
    _
  %s6 = ssub.s32 1, %s4
  %s7 = scalar_select 0, %s6, %s4
  $region1: #{tpu_custom_call.1} parent=0
    #allocation2 [shape = 'u8[180224]{0}', space=vmem, size = 0x2c000, scoped, tag = 'output window, operand 0, single buffered']
    #allocation3 [shape = 's32[1]{0}', space=sflag, size = 0x4, scoped, tag = 'scoped memory for tpu_custom_call.1']
    %8 = vsyncpa [#allocation3], 0
    // Predicated region
    $region2: #{tpu_custom_call.1} parent=1 // pred_check
      _
    $region3: #{tpu_custom_call.1} parent=1 // pred_check_branch
      %10 = sbr.rel (0) target = $region5
    $region4: #{tpu_custom_call.1} parent=1 // pred_region
      _
    $region5: #{tpu_custom_call.1} parent=1 // pred_fallthru
      _
    // Predicated region
    $region6: #{tpu_custom_call.1} parent=1 // pred_check
      _
    $region7: #{tpu_custom_call.1} parent=1 // pred_check_branch
      %12 = sbr.rel (0) target = $region9
    $region8: #{tpu_custom_call.1} parent=1 // pred_region
      _
    $region9: #{tpu_custom_call.1} parent=1 // pred_fallthru
      _
    // Predicated region
    $region10: #{tpu_custom_call.1} parent=1 // pred_check
      _
    $region11: #{tpu_custom_call.1} parent=1 // pred_check_branch
      %14 = sbr.rel (0) target = $region13
    $region12: #{tpu_custom_call.1} parent=1 // pred_region
      _
    $region13: #{tpu_custom_call.1} parent=1 // pred_fallthru
      _
    %v16 = vld [vmem:[%s0] sm:$0xff]
    %v17 = vld [vmem:[%s0 + $0x8] sm:$0xff]
    %v18 = vld [vmem:[%s0 + $0x10] sm:$0xff]
    %v19 = vld [vmem:[%s0 + $0x18] sm:$0xff]
    %v20 = vld [vmem:[%s0 + $0x20] sm:$0xff]
    %v21 = vld [vmem:[%s0 + $0x28] sm:$0xff]
    %v22 = vld [vmem:[%s0 + $0x30] sm:$0xff]
    %v23 = vld [vmem:[%s0 + $0x38] sm:$0xff]
    %v24 = vld [vmem:[%s0 + $0x40] sm:$0xff]
    %v25 = vld [vmem:[%s0 + $0x48] sm:$0xff]
    %v26 = vld [vmem:[%s0 + $0x50] sm:$0xff]
    %v27 = vld [vmem:[%s0 + $0x58] sm:$0xff]
    %v28 = vld [vmem:[%s0 + $0x60] sm:$0xff]
    %v29 = vld [vmem:[%s0 + $0x68] sm:$0xff]
    %v30 = vld [vmem:[%s0 + $0x70] sm:$0xff]
    %v31 = vld [vmem:[%s0 + $0x78] sm:$0xff]
    %v32 = vld [vmem:[%s0 + $0x80] sm:$0xff]
    %v33 = vld [vmem:[%s0 + $0x88] sm:$0xff]
    %v34 = vld [vmem:[%s0 + $0x90] sm:$0xff]
    %v35 = vld [vmem:[%s0 + $0x98] sm:$0xff]
    %v36 = vld [vmem:[%s0 + $0xa0] sm:$0xff]
    %v37 = vld [vmem:[%s0 + $0xa8] sm:$0xff]
    %v38 = vld [vmem:[%s0 + $0xb0] sm:$0xff]
    %v39 = vld [vmem:[%s0 + $0xb8] sm:$0xff]
    %v40 = vld [vmem:[%s0 + $0xc0] sm:$0xff]
    %v41 = vld [vmem:[%s0 + $0xc8] sm:$0xff]
    %v42 = vld [vmem:[%s0 + $0xd0] sm:$0xff]
    %v43 = vld [vmem:[%s0 + $0xd8] sm:$0xff]
    %v44 = vld [vmem:[%s0 + $0xe0] sm:$0xff]
    %v45 = vld [vmem:[%s0 + $0xe8] sm:$0xff]
    %v46 = vld [vmem:[%s0 + $0xf0] sm:$0xff]
    %v47 = vld [vmem:[%s0 + $0xf8] sm:$0xff]
    %v48 = vld [vmem:[%s0 + $0x100] sm:$0xff]
    %v49 = vld [vmem:[%s0 + $0x108] sm:$0xff]
    %v50 = vld [vmem:[%s0 + $0x110] sm:$0xff]
    %v51 = vld [vmem:[%s0 + $0x118] sm:$0xff]
    %v52 = vld [vmem:[%s0 + $0x120] sm:$0xff]
    %v53 = vld [vmem:[%s0 + $0x128] sm:$0xff]
    %v54 = vld [vmem:[%s0 + $0x130] sm:$0xff]
    %v55 = vld [vmem:[%s0 + $0x138] sm:$0xff]
    %v56 = vld [vmem:[%s0 + $0x140] sm:$0xff]
    %v57 = vld [vmem:[%s0 + $0x148] sm:$0xff]
    %v58 = vld [vmem:[%s0 + $0x150] sm:$0xff]
    %v59 = vld [vmem:[%s0 + $0x158] sm:$0xff]
    %v60 = vld [vmem:[%s0 + $0x160] sm:$0xff]
    %v61 = vld [vmem:[%s0 + $0x168] sm:$0xff]
    %v62 = vld [vmem:[%s0 + $0x170] sm:$0xff]
    %v63 = vld [vmem:[%s0 + $0x178] sm:$0xff]
    %v64 = vld [vmem:[%s0 + $0x180] sm:$0xff]
    %v65 = vld [vmem:[%s0 + $0x188] sm:$0xff]
    %v66 = vld [vmem:[%s0 + $0x190] sm:$0xff]
    %v67 = vld [vmem:[%s0 + $0x198] sm:$0xff]
    %v68 = vld [vmem:[%s0 + $0x1a0] sm:$0xff]
    %v69 = vld [vmem:[%s0 + $0x1a8] sm:$0xff]
    %v70 = vld [vmem:[%s0 + $0x1b0] sm:$0xff]
    %v71 = vld [vmem:[%s0 + $0x1b8] sm:$0xff]
    %v72 = vld [vmem:[%s0 + $0x1c0] sm:$0xff]
    %v73 = vld [vmem:[%s0 + $0x1c8] sm:$0xff]
    %v74 = vld [vmem:[%s0 + $0x1d0] sm:$0xff]
    %v75 = vld [vmem:[%s0 + $0x1d8] sm:$0xff]
    %v76 = vld [vmem:[%s0 + $0x1e0] sm:$0xff]
    %v77 = vld [vmem:[%s0 + $0x1e8] sm:$0xff]
    %v78 = vld [vmem:[%s0 + $0x1f0] sm:$0xff]
    %v79 = vld [vmem:[%s0 + $0x1f8] sm:$0xff]
    %v80 = vld [vmem:[%s0 + $0x200] sm:$0xff]
    %v81 = vld [vmem:[%s0 + $0x208] sm:$0xff]
    %v82 = vld [vmem:[%s0 + $0x210] sm:$0xff]
    %v83 = vld [vmem:[%s0 + $0x218] sm:$0xff]
    %v84 = vld [vmem:[%s0 + $0x220] sm:$0xff]
    %v85 = vld [vmem:[%s0 + $0x228] sm:$0xff]
    %v86 = vld [vmem:[%s0 + $0x230] sm:$0xff]
    %v87 = vld [vmem:[%s0 + $0x238] sm:$0xff]
    %v88 = vld [vmem:[%s0 + $0x240] sm:$0xff]
    %v89 = vld [vmem:[%s0 + $0x248] sm:$0xff]
    %v90 = vld [vmem:[%s0 + $0x250] sm:$0xff]
    %v91 = vld [vmem:[%s0 + $0x258] sm:$0xff]
    %v92 = vld [vmem:[%s0 + $0x260] sm:$0xff]
    %v93 = vld [vmem:[%s0 + $0x268] sm:$0xff]
    %v94 = vld [vmem:[%s0 + $0x270] sm:$0xff]
    %v95 = vld [vmem:[%s0 + $0x278] sm:$0xff]
    %v96 = vld [vmem:[%s0 + $0x280] sm:$0xff]
    %v97 = vld [vmem:[%s0 + $0x288] sm:$0xff]
    %v98 = vld [vmem:[%s0 + $0x290] sm:$0xff]
    %v99 = vld [vmem:[%s0 + $0x298] sm:$0xff]
    %v100 = vld [vmem:[%s0 + $0x2a0] sm:$0xff]
    %v101 = vld [vmem:[%s0 + $0x2a8] sm:$0xff]
    %v102 = vld [vmem:[%s0 + $0x2b0] sm:$0xff]
    %v103 = vld [vmem:[%s0 + $0x2b8] sm:$0xff]
    %v104 = vld [vmem:[%s0 + $0x2c0] sm:$0xff]
    %v105 = vld [vmem:[%s0 + $0x2c8] sm:$0xff]
    %v106 = vld [vmem:[%s0 + $0x2d0] sm:$0xff]
    %v107 = vld [vmem:[%s0 + $0x2d8] sm:$0xff]
    %v108 = vld [vmem:[%s0 + $0x2e0] sm:$0xff]
    %v109 = vld [vmem:[%s0 + $0x2e8] sm:$0xff]
    %v110 = vld [vmem:[%s0 + $0x2f0] sm:$0xff]
    %v111 = vld [vmem:[%s0 + $0x2f8] sm:$0xff]
    %v112 = vld [vmem:[%s0 + $0x300] sm:$0xff]
    %v113 = vld [vmem:[%s0 + $0x308] sm:$0xff]
    %v114 = vld [vmem:[%s0 + $0x310] sm:$0xff]
    %v115 = vld [vmem:[%s0 + $0x318] sm:$0xff]
    %v116 = vld [vmem:[%s0 + $0x320] sm:$0xff]
    %v117 = vld [vmem:[%s0 + $0x328] sm:$0xff]
    %v118 = vld [vmem:[%s0 + $0x330] sm:$0xff]
    %v119 = vld [vmem:[%s0 + $0x338] sm:$0xff]
    %v120 = vld [vmem:[%s0 + $0x340] sm:$0xff]
    %v121 = vld [vmem:[%s0 + $0x348] sm:$0xff]
    %v122 = vld [vmem:[%s0 + $0x350] sm:$0xff]
    %v123 = vld [vmem:[%s0 + $0x358] sm:$0xff]
    %v124 = vld [vmem:[%s0 + $0x360] sm:$0xff]
    %v125 = vld [vmem:[%s0 + $0x368] sm:$0xff]
    %v126 = vld [vmem:[%s0 + $0x370] sm:$0xff]
    %v127 = vld [vmem:[%s0 + $0x378] sm:$0xff]
    %v128 = vld [vmem:[%s0 + $0x380] sm:$0xff]
    %v129 = vld [vmem:[%s0 + $0x388] sm:$0xff]
    %v130 = vld [vmem:[%s0 + $0x390] sm:$0xff]
    %v131 = vld [vmem:[%s0 + $0x398] sm:$0xff]
    %v132 = vld [vmem:[%s0 + $0x3a0] sm:$0xff]
    %v133 = vld [vmem:[%s0 + $0x3a8] sm:$0xff]
    %v134 = vld [vmem:[%s0 + $0x3b0] sm:$0xff]
    %v135 = vld [vmem:[%s0 + $0x3b8] sm:$0xff]
    %v136 = vld [vmem:[%s0 + $0x3c0] sm:$0xff]
    %v137 = vld [vmem:[%s0 + $0x3c8] sm:$0xff]
    %v138 = vld [vmem:[%s0 + $0x3d0] sm:$0xff]
    %v139 = vld [vmem:[%s0 + $0x3d8] sm:$0xff]
    %v140 = vld [vmem:[%s0 + $0x3e0] sm:$0xff]
    %v141 = vld [vmem:[%s0 + $0x3e8] sm:$0xff]
    %v142 = vld [vmem:[%s0 + $0x3f0] sm:$0xff]
    %v143 = vld [vmem:[%s0 + $0x3f8] sm:$0xff]
    %v144 = vld [vmem:[%s0 + $0x400] sm:$0xff]
    %v145 = vld [vmem:[%s0 + $0x408] sm:$0xff]
    %v146 = vld [vmem:[%s0 + $0x410] sm:$0xff]
    %v147 = vld [vmem:[%s0 + $0x418] sm:$0xff]
    %v148 = vld [vmem:[%s0 + $0x420] sm:$0xff]
    %v149 = vld [vmem:[%s0 + $0x428] sm:$0xff]
    %v150 = vld [vmem:[%s0 + $0x430] sm:$0xff]
    %v151 = vld [vmem:[%s0 + $0x438] sm:$0xff]
    %v152 = vld [vmem:[%s0 + $0x440] sm:$0xff]
    %v153 = vld [vmem:[%s0 + $0x448] sm:$0xff]
    %v154 = vld [vmem:[%s0 + $0x450] sm:$0xff]
    %v155 = vld [vmem:[%s0 + $0x458] sm:$0xff]
    %v156 = vld [vmem:[%s0 + $0x460] sm:$0xff]
    %v157 = vld [vmem:[%s0 + $0x468] sm:$0xff]
    %v158 = vld [vmem:[%s0 + $0x470] sm:$0xff]
    %v159 = vld [vmem:[%s0 + $0x478] sm:$0xff]
    %v160 = vld [vmem:[%s0 + $0x480] sm:$0xff]
    %v161 = vld [vmem:[%s0 + $0x488] sm:$0xff]
    %v162 = vld [vmem:[%s0 + $0x490] sm:$0xff]
    %v163 = vld [vmem:[%s0 + $0x498] sm:$0xff]
    %v164 = vld [vmem:[%s0 + $0x4a0] sm:$0xff]
    %v165 = vld [vmem:[%s0 + $0x4a8] sm:$0xff]
    %v166 = vld [vmem:[%s0 + $0x4b0] sm:$0xff]
    %v167 = vld [vmem:[%s0 + $0x4b8] sm:$0xff]
    %v168 = vld [vmem:[%s0 + $0x4c0] sm:$0xff]
    %v169 = vld [vmem:[%s0 + $0x4c8] sm:$0xff]
    %v170 = vld [vmem:[%s0 + $0x4d0] sm:$0xff]
    %v171 = vld [vmem:[%s0 + $0x4d8] sm:$0xff]
    %v172 = vld [vmem:[%s0 + $0x4e0] sm:$0xff]
    %v173 = vld [vmem:[%s0 + $0x4e8] sm:$0xff]
    %v174 = vld [vmem:[%s0 + $0x4f0] sm:$0xff]
    %v175 = vld [vmem:[%s0 + $0x4f8] sm:$0xff]
    %v176 = vld [vmem:[%s0 + $0x500] sm:$0xff]
    %v177 = vld [vmem:[%s0 + $0x508] sm:$0xff]
    %v178 = vld [vmem:[%s0 + $0x510] sm:$0xff]
    %v179 = vld [vmem:[%s0 + $0x518] sm:$0xff]
    %v180 = vld [vmem:[%s0 + $0x520] sm:$0xff]
    %v181 = vld [vmem:[%s0 + $0x528] sm:$0xff]
    %v182 = vld [vmem:[%s0 + $0x530] sm:$0xff]
    %v183 = vld [vmem:[%s0 + $0x538] sm:$0xff]
    %v184 = vld [vmem:[%s0 + $0x540] sm:$0xff]
    %v185 = vld [vmem:[%s0 + $0x548] sm:$0xff]
    %v186 = vld [vmem:[%s0 + $0x550] sm:$0xff]
    %v187 = vld [vmem:[%s0 + $0x558] sm:$0xff]
    %v188 = vld [vmem:[%s0 + $0x560] sm:$0xff]
    %v189 = vld [vmem:[%s0 + $0x568] sm:$0xff]
    %v190 = vld [vmem:[%s0 + $0x570] sm:$0xff]
    %v191 = vld [vmem:[%s0 + $0x578] sm:$0xff]
    %v192 = vld [vmem:[%s0 + $0x580] sm:$0xff]
    %v193 = vld [vmem:[%s0 + $0x588] sm:$0xff]
    %v194 = vld [vmem:[%s0 + $0x590] sm:$0xff]
    %v195 = vld [vmem:[%s0 + $0x598] sm:$0xff]
    %v196 = vld [vmem:[%s0 + $0x5a0] sm:$0xff]
    %v197 = vld [vmem:[%s0 + $0x5a8] sm:$0xff]
    %v198 = vld [vmem:[%s0 + $0x5b0] sm:$0xff]
    %v199 = vld [vmem:[%s0 + $0x5b8] sm:$0xff]
    %v200 = vld [vmem:[%s0 + $0x5c0] sm:$0xff]
    %v201 = vld [vmem:[%s0 + $0x5c8] sm:$0xff]
    %v202 = vld [vmem:[%s0 + $0x5d0] sm:$0xff]
    %v203 = vld [vmem:[%s0 + $0x5d8] sm:$0xff]
    %v204 = vld [vmem:[%s0 + $0x5e0] sm:$0xff]
    %v205 = vld [vmem:[%s0 + $0x5e8] sm:$0xff]
    %v206 = vld [vmem:[%s0 + $0x5f0] sm:$0xff]
    %v207 = vld [vmem:[%s0 + $0x5f8] sm:$0xff]
    %v208 = vld [vmem:[%s0 + $0x600] sm:$0xff]
    %v209 = vld [vmem:[%s0 + $0x608] sm:$0xff]
    %v210 = vld [vmem:[%s0 + $0x610] sm:$0xff]
    %v211 = vld [vmem:[%s0 + $0x618] sm:$0xff]
    %v212 = vld [vmem:[%s0 + $0x620] sm:$0xff]
    %v213 = vld [vmem:[%s0 + $0x628] sm:$0xff]
    %v214 = vld [vmem:[%s0 + $0x630] sm:$0xff]
    %v215 = vld [vmem:[%s0 + $0x638] sm:$0xff]
    %v216 = vld [vmem:[%s0 + $0x640] sm:$0xff]
    %v217 = vld [vmem:[%s0 + $0x648] sm:$0xff]
    %v218 = vld [vmem:[%s0 + $0x650] sm:$0xff]
    %v219 = vld [vmem:[%s0 + $0x658] sm:$0xff]
    %v220 = vld [vmem:[%s0 + $0x660] sm:$0xff]
    %v221 = vld [vmem:[%s0 + $0x668] sm:$0xff]
    %v222 = vld [vmem:[%s0 + $0x670] sm:$0xff]
    %v223 = vld [vmem:[%s0 + $0x678] sm:$0xff]
    %v224 = vld [vmem:[%s0 + $0x680] sm:$0xff]
    %v225 = vld [vmem:[%s0 + $0x688] sm:$0xff]
    %v226 = vld [vmem:[%s0 + $0x690] sm:$0xff]
    %v227 = vld [vmem:[%s0 + $0x698] sm:$0xff]
    %v228 = vld [vmem:[%s0 + $0x6a0] sm:$0xff]
    %v229 = vld [vmem:[%s0 + $0x6a8] sm:$0xff]
    %v230 = vld [vmem:[%s0 + $0x6b0] sm:$0xff]
    %v231 = vld [vmem:[%s0 + $0x6b8] sm:$0xff]
    %v232 = vld [vmem:[%s0 + $0x6c0] sm:$0xff]
    %v233 = vld [vmem:[%s0 + $0x6c8] sm:$0xff]
    %v234 = vld [vmem:[%s0 + $0x6d0] sm:$0xff]
    %v235 = vld [vmem:[%s0 + $0x6d8] sm:$0xff]
    %v236 = vld [vmem:[%s0 + $0x6e0] sm:$0xff]
    %v237 = vld [vmem:[%s0 + $0x6e8] sm:$0xff]
    %v238 = vld [vmem:[%s0 + $0x6f0] sm:$0xff]
    %v239 = vld [vmem:[%s0 + $0x6f8] sm:$0xff]
    %v240 = vld [vmem:[%s0 + $0x700] sm:$0xff]
    %v241 = vld [vmem:[%s0 + $0x708] sm:$0xff]
    %v242 = vld [vmem:[%s0 + $0x710] sm:$0xff]
    %v243 = vld [vmem:[%s0 + $0x718] sm:$0xff]
    %v244 = vld [vmem:[%s0 + $0x720] sm:$0xff]
    %v245 = vld [vmem:[%s0 + $0x728] sm:$0xff]
    %v246 = vld [vmem:[%s0 + $0x730] sm:$0xff]
    %v247 = vld [vmem:[%s0 + $0x738] sm:$0xff]
    %v248 = vld [vmem:[%s0 + $0x740] sm:$0xff]
    %v249 = vld [vmem:[%s0 + $0x748] sm:$0xff]
    %v250 = vld [vmem:[%s0 + $0x750] sm:$0xff]
    %v251 = vld [vmem:[%s0 + $0x758] sm:$0xff]
    %v252 = vld [vmem:[%s0 + $0x760] sm:$0xff]
    %v253 = vld [vmem:[%s0 + $0x768] sm:$0xff]
    %v254 = vld [vmem:[%s0 + $0x770] sm:$0xff]
    %v255 = vld [vmem:[%s0 + $0x778] sm:$0xff]
    %v256 = vld [vmem:[%s0 + $0x780] sm:$0xff]
    %v257 = vld [vmem:[%s0 + $0x788] sm:$0xff]
    %v258 = vld [vmem:[%s0 + $0x790] sm:$0xff]
    %v259 = vld [vmem:[%s0 + $0x798] sm:$0xff]
    %v260 = vld [vmem:[%s0 + $0x7a0] sm:$0xff]
    %v261 = vld [vmem:[%s0 + $0x7a8] sm:$0xff]
    %v262 = vld [vmem:[%s0 + $0x7b0] sm:$0xff]
    %v263 = vld [vmem:[%s0 + $0x7b8] sm:$0xff]
    %v264 = vld [vmem:[%s0 + $0x7c0] sm:$0xff]
    %v265 = vld [vmem:[%s0 + $0x7c8] sm:$0xff]
    %v266 = vld [vmem:[%s0 + $0x7d0] sm:$0xff]
    %v267 = vld [vmem:[%s0 + $0x7d8] sm:$0xff]
    %v268 = vld [vmem:[%s0 + $0x7e0] sm:$0xff]
    %v269 = vld [vmem:[%s0 + $0x7e8] sm:$0xff]
    %v270 = vld [vmem:[%s0 + $0x7f0] sm:$0xff]
    %v271 = vld [vmem:[%s0 + $0x7f8] sm:$0xff]
    %v272 = vld [vmem:[%s0 + $0x800] sm:$0xff]
    %v273 = vld [vmem:[%s0 + $0x808] sm:$0xff]
    %v274 = vld [vmem:[%s0 + $0x810] sm:$0xff]
    %v275 = vld [vmem:[%s0 + $0x818] sm:$0xff]
    %v276 = vld [vmem:[%s0 + $0x820] sm:$0xff]
    %v277 = vld [vmem:[%s0 + $0x828] sm:$0xff]
    %v278 = vld [vmem:[%s0 + $0x830] sm:$0xff]
    %v279 = vld [vmem:[%s0 + $0x838] sm:$0xff]
    %v280 = vpack.c.bf16 %v18, %v16
    %v281 = vpack.c.bf16 %v19, %v17
    %v282 = vpack.c.bf16 %v22, %v20
    %v283 = vpack.c.bf16 %v23, %v21
    %v284 = vpack.c.bf16 %v26, %v24
    %v285 = vpack.c.bf16 %v27, %v25
    %v286 = vpack.c.bf16 %v30, %v28
    %v287 = vpack.c.bf16 %v31, %v29
    %v288 = vpack.c.bf16 %v34, %v32
    %v289 = vpack.c.bf16 %v35, %v33
    %v290 = vpack.c.bf16 %v38, %v36
    %v291 = vpack.c.bf16 %v39, %v37
    %v292 = vpack.c.bf16 %v42, %v40
    %v293 = vpack.c.bf16 %v43, %v41
    %v294 = vpack.c.bf16 %v46, %v44
    %v295 = vpack.c.bf16 %v47, %v45
    %v296 = vpack.c.bf16 %v50, %v48
    %v297 = vpack.c.bf16 %v51, %v49
    %v298 = vpack.c.bf16 %v54, %v52
    %v299 = vpack.c.bf16 %v55, %v53
    %v300 = vpack.c.bf16 %v58, %v56
    %v301 = vpack.c.bf16 %v59, %v57
    %v302 = vpack.c.bf16 %v62, %v60
    %v303 = vpack.c.bf16 %v63, %v61
    %v304 = vpack.c.bf16 %v66, %v64
    %v305 = vpack.c.bf16 %v67, %v65
    %v306 = vpack.c.bf16 %v70, %v68
    %v307 = vpack.c.bf16 %v71, %v69
    %v308 = vpack.c.bf16 %v74, %v72
    %v309 = vpack.c.bf16 %v75, %v73
    %v310 = vpack.c.bf16 %v78, %v76
    %v311 = vpack.c.bf16 %v79, %v77
    %v312 = vpack.c.bf16 %v82, %v80
    %v313 = vpack.c.bf16 %v83, %v81
    %v314 = vpack.c.bf16 %v86, %v84
    %v315 = vpack.c.bf16 %v87, %v85
    %v316 = vpack.c.bf16 %v90, %v88
    %v317 = vpack.c.bf16 %v91, %v89
    %v318 = vpack.c.bf16 %v94, %v92
    %v319 = vpack.c.bf16 %v95, %v93
    %v320 = vpack.c.bf16 %v98, %v96
    %v321 = vpack.c.bf16 %v99, %v97
    %v322 = vpack.c.bf16 %v102, %v100
    %v323 = vpack.c.bf16 %v103, %v101
    %v324 = vpack.c.bf16 %v106, %v104
    %v325 = vpack.c.bf16 %v107, %v105
    %v326 = vpack.c.bf16 %v110, %v108
    %v327 = vpack.c.bf16 %v111, %v109
    %v328 = vpack.c.bf16 %v114, %v112
    %v329 = vpack.c.bf16 %v115, %v113
    %v330 = vpack.c.bf16 %v118, %v116
    %v331 = vpack.c.bf16 %v119, %v117
    %v332 = vpack.c.bf16 %v122, %v120
    %v333 = vpack.c.bf16 %v123, %v121
    %v334 = vpack.c.bf16 %v126, %v124
    %v335 = vpack.c.bf16 %v127, %v125
    %v336 = vpack.c.bf16 %v130, %v128
    %v337 = vpack.c.bf16 %v131, %v129
    %v338 = vpack.c.bf16 %v134, %v132
    %v339 = vpack.c.bf16 %v135, %v133
    %v340 = vpack.c.bf16 %v138, %v136
    %v341 = vpack.c.bf16 %v139, %v137
    %v342 = vpack.c.bf16 %v142, %v140
    %v343 = vpack.c.bf16 %v143, %v141
    %v344 = vpack.c.bf16 %v146, %v144
    %v345 = vpack.c.bf16 %v147, %v145
    %v346 = vpack.c.bf16 %v150, %v148
    %v347 = vpack.c.bf16 %v151, %v149
    %v348 = vpack.c.bf16 %v154, %v152
    %v349 = vpack.c.bf16 %v155, %v153
    %v350 = vpack.c.bf16 %v158, %v156
    %v351 = vpack.c.bf16 %v159, %v157
    %v352 = vpack.c.bf16 %v162, %v160
    %v353 = vpack.c.bf16 %v163, %v161
    %v354 = vpack.c.bf16 %v166, %v164
    %v355 = vpack.c.bf16 %v167, %v165
    %v356 = vpack.c.bf16 %v170, %v168
    %v357 = vpack.c.bf16 %v171, %v169
    %v358 = vpack.c.bf16 %v174, %v172
    %v359 = vpack.c.bf16 %v175, %v173
    %v360 = vpack.c.bf16 %v178, %v176
    %v361 = vpack.c.bf16 %v179, %v177
    %v362 = vpack.c.bf16 %v182, %v180
    %v363 = vpack.c.bf16 %v183, %v181
    %v364 = vpack.c.bf16 %v186, %v184
    %v365 = vpack.c.bf16 %v187, %v185
    %v366 = vpack.c.bf16 %v190, %v188
    %v367 = vpack.c.bf16 %v191, %v189
    %v368 = vpack.c.bf16 %v194, %v192
    %v369 = vpack.c.bf16 %v195, %v193
    %v370 = vpack.c.bf16 %v198, %v196
    %v371 = vpack.c.bf16 %v199, %v197
    %v372 = vpack.c.bf16 %v202, %v200
    %v373 = vpack.c.bf16 %v203, %v201
    %v374 = vpack.c.bf16 %v206, %v204
    %v375 = vpack.c.bf16 %v207, %v205
    %v376 = vpack.c.bf16 %v210, %v208
    %v377 = vpack.c.bf16 %v211, %v209
    %v378 = vpack.c.bf16 %v214, %v212
    %v379 = vpack.c.bf16 %v215, %v213
    %v380 = vpack.c.bf16 %v218, %v216
    %v381 = vpack.c.bf16 %v219, %v217
    %v382 = vpack.c.bf16 %v222, %v220
    %v383 = vpack.c.bf16 %v223, %v221
    %v384 = vpack.c.bf16 %v226, %v224
    %v385 = vpack.c.bf16 %v227, %v225
    %v386 = vpack.c.bf16 %v230, %v228
    %v387 = vpack.c.bf16 %v231, %v229
    %v388 = vpack.c.bf16 %v234, %v232
    %v389 = vpack.c.bf16 %v235, %v233
    %v390 = vpack.c.bf16 %v238, %v236
    %v391 = vpack.c.bf16 %v239, %v237
    %v392 = vpack.c.bf16 %v242, %v240
    %v393 = vpack.c.bf16 %v243, %v241
    %v394 = vpack.c.bf16 %v246, %v244
    %v395 = vpack.c.bf16 %v247, %v245
    %v396 = vpack.c.bf16 %v250, %v248
    %v397 = vpack.c.bf16 %v251, %v249
    %v398 = vpack.c.bf16 %v254, %v252
    %v399 = vpack.c.bf16 %v255, %v253
    %v400 = vpack.c.bf16 %v258, %v256
    %v401 = vpack.c.bf16 %v259, %v257
    %v402 = vpack.c.bf16 %v262, %v260
    %v403 = vpack.c.bf16 %v263, %v261
    %v404 = vpack.c.bf16 %v266, %v264
    %v405 = vpack.c.bf16 %v267, %v265
    %v406 = vpack.c.bf16 %v270, %v268
    %v407 = vpack.c.bf16 %v271, %v269
    %v408 = vpack.c.bf16 %v274, %v272
    %v409 = vpack.c.bf16 %v275, %v273
    %v410 = vpack.c.bf16 %v278, %v276
    %v411 = vpack.c.bf16 %v279, %v277
    %v412 = vld [vmem:[%s1] sm:$0xff]
    %v413 = vld [vmem:[%s1 + $0x8] sm:$0xff]
    %v414 = vld [vmem:[%s1 + $0x10] sm:$0xff]
    %v415 = vld [vmem:[%s1 + $0x18] sm:$0xff]
    %v416 = vld [vmem:[%s1 + $0x20] sm:$0xf]
    %v417 = vld [vmem:[%s1 + $0x24] sm:$0xff]
    %v418 = vld [vmem:[%s1 + $0x2c] sm:$0xff]
    %v419 = vld [vmem:[%s1 + $0x34] sm:$0xff]
    %v420 = vld [vmem:[%s1 + $0x3c] sm:$0xff]
    %v421 = vld [vmem:[%s1 + $0x44] sm:$0xf]
    %v422 = vld [vmem:[%s1 + $0x48] sm:$0xff]
    %v423 = vld [vmem:[%s1 + $0x50] sm:$0xff]
    %v424 = vld [vmem:[%s1 + $0x58] sm:$0xff]
    %v425 = vld [vmem:[%s1 + $0x60] sm:$0xff]
    %v426 = vld [vmem:[%s1 + $0x68] sm:$0xf]
    %v427 = vld [vmem:[%s1 + $0x6c] sm:$0xff]
    %v428 = vld [vmem:[%s1 + $0x74] sm:$0xff]
    %v429 = vld [vmem:[%s1 + $0x7c] sm:$0xff]
    %v430 = vld [vmem:[%s1 + $0x84] sm:$0xff]
    %v431 = vld [vmem:[%s1 + $0x8c] sm:$0xf]
    %v432 = vld [vmem:[%s1 + $0x90] sm:$0xff]
    %v433 = vld [vmem:[%s1 + $0x98] sm:$0xff]
    %v434 = vld [vmem:[%s1 + $0xa0] sm:$0xff]
    %v435 = vld [vmem:[%s1 + $0xa8] sm:$0xff]
    %v436 = vld [vmem:[%s1 + $0xb0] sm:$0xf]
    %v437 = vld [vmem:[%s1 + $0xb4] sm:$0xff]
    %v438 = vld [vmem:[%s1 + $0xbc] sm:$0xff]
    %v439 = vld [vmem:[%s1 + $0xc4] sm:$0xff]
    %v440 = vld [vmem:[%s1 + $0xcc] sm:$0xff]
    %v441 = vld [vmem:[%s1 + $0xd4] sm:$0xf]
    %v442 = vld [vmem:[%s1 + $0xd8] sm:$0xff]
    %v443 = vld [vmem:[%s1 + $0xe0] sm:$0xff]
    %v444 = vld [vmem:[%s1 + $0xe8] sm:$0xff]
    %v445 = vld [vmem:[%s1 + $0xf0] sm:$0xff]
    %v446 = vld [vmem:[%s1 + $0xf8] sm:$0xf]
    %v447 = vld [vmem:[%s1 + $0xfc] sm:$0xff]
    %v448 = vld [vmem:[%s1 + $0x104] sm:$0xff]
    %v449 = vld [vmem:[%s1 + $0x10c] sm:$0xff]
    %v450 = vld [vmem:[%s1 + $0x114] sm:$0xff]
    %v451 = vld [vmem:[%s1 + $0x11c] sm:$0xf]
    %v452 = vld [vmem:[%s1 + $0x120] sm:$0xff]
    %v453 = vld [vmem:[%s1 + $0x128] sm:$0xff]
    %v454 = vld [vmem:[%s1 + $0x130] sm:$0xff]
    %v455 = vld [vmem:[%s1 + $0x138] sm:$0xff]
    %v456 = vld [vmem:[%s1 + $0x140] sm:$0xf]
    %v457 = vld [vmem:[%s1 + $0x144] sm:$0xff]
    %v458 = vld [vmem:[%s1 + $0x14c] sm:$0xff]
    %v459 = vld [vmem:[%s1 + $0x154] sm:$0xff]
    %v460 = vld [vmem:[%s1 + $0x15c] sm:$0xff]
    %v461 = vld [vmem:[%s1 + $0x164] sm:$0xf]
    %v462 = vld [vmem:[%s1 + $0x168] sm:$0xff]
    %v463 = vld [vmem:[%s1 + $0x170] sm:$0xff]
    %v464 = vld [vmem:[%s1 + $0x178] sm:$0xff]
    %v465 = vld [vmem:[%s1 + $0x180] sm:$0xff]
    %v466 = vld [vmem:[%s1 + $0x188] sm:$0xf]
    %v467 = vld [vmem:[%s1 + $0x18c] sm:$0xff]
    %v468 = vld [vmem:[%s1 + $0x194] sm:$0xff]
    %v469 = vld [vmem:[%s1 + $0x19c] sm:$0xff]
    %v470 = vld [vmem:[%s1 + $0x1a4] sm:$0xff]
    %v471 = vld [vmem:[%s1 + $0x1ac] sm:$0xf]
    %v472 = vld [vmem:[%s1 + $0x1b0] sm:$0xff]
    %v473 = vld [vmem:[%s1 + $0x1b8] sm:$0xff]
    %v474 = vld [vmem:[%s1 + $0x1c0] sm:$0xff]
    %v475 = vld [vmem:[%s1 + $0x1c8] sm:$0xff]
    %v476 = vld [vmem:[%s1 + $0x1d0] sm:$0xf]
    %v477 = vld [vmem:[%s1 + $0x1d4] sm:$0xff]
    %v478 = vld [vmem:[%s1 + $0x1dc] sm:$0xff]
    %v479 = vld [vmem:[%s1 + $0x1e4] sm:$0xff]
    %v480 = vld [vmem:[%s1 + $0x1ec] sm:$0xff]
    %v481 = vld [vmem:[%s1 + $0x1f4] sm:$0xf]
    %v482 = vld [vmem:[%s1 + $0x1f8] sm:$0xff]
    %v483 = vld [vmem:[%s1 + $0x200] sm:$0xff]
    %v484 = vld [vmem:[%s1 + $0x208] sm:$0xff]
    %v485 = vld [vmem:[%s1 + $0x210] sm:$0xff]
    %v486 = vld [vmem:[%s1 + $0x218] sm:$0xf]
    %v487 = vld [vmem:[%s1 + $0x21c] sm:$0xff]
    %v488 = vld [vmem:[%s1 + $0x224] sm:$0xff]
    %v489 = vld [vmem:[%s1 + $0x22c] sm:$0xff]
    %v490 = vld [vmem:[%s1 + $0x234] sm:$0xff]
    %v491 = vld [vmem:[%s1 + $0x23c] sm:$0xf]
    %v492 = vld [vmem:[%s1 + $0x240] sm:$0xff]
    %v493 = vld [vmem:[%s1 + $0x248] sm:$0xff]
    %v494 = vld [vmem:[%s1 + $0x250] sm:$0xff]
    %v495 = vld [vmem:[%s1 + $0x258] sm:$0xff]
    %v496 = vld [vmem:[%s1 + $0x260] sm:$0xf]
    %v497 = vld [vmem:[%s1 + $0x264] sm:$0xff]
    %v498 = vld [vmem:[%s1 + $0x26c] sm:$0xff]
    %v499 = vld [vmem:[%s1 + $0x274] sm:$0xff]
    %v500 = vld [vmem:[%s1 + $0x27c] sm:$0xff]
    %v501 = vld [vmem:[%s1 + $0x284] sm:$0xf]
    %v502 = vld [vmem:[%s1 + $0x288] sm:$0xff]
    %v503 = vld [vmem:[%s1 + $0x290] sm:$0xff]
    %v504 = vld [vmem:[%s1 + $0x298] sm:$0xff]
    %v505 = vld [vmem:[%s1 + $0x2a0] sm:$0xff]
    %v506 = vld [vmem:[%s1 + $0x2a8] sm:$0xf]
    %v507 = vld [vmem:[%s1 + $0x2ac] sm:$0xff]
    %v508 = vld [vmem:[%s1 + $0x2b4] sm:$0xff]
    %v509 = vld [vmem:[%s1 + $0x2bc] sm:$0xff]
    %v510 = vld [vmem:[%s1 + $0x2c4] sm:$0xff]
    %v511 = vld [vmem:[%s1 + $0x2cc] sm:$0xf]
    %v512 = vld [vmem:[%s1 + $0x2d0] sm:$0xff]
    %v513 = vld [vmem:[%s1 + $0x2d8] sm:$0xff]
    %v514 = vld [vmem:[%s1 + $0x2e0] sm:$0xff]
    %v515 = vld [vmem:[%s1 + $0x2e8] sm:$0xff]
    %v516 = vld [vmem:[%s1 + $0x2f0] sm:$0xf]
    %v517 = vld [vmem:[%s1 + $0x2f4] sm:$0xff]
    %v518 = vld [vmem:[%s1 + $0x2fc] sm:$0xff]
    %v519 = vld [vmem:[%s1 + $0x304] sm:$0xff]
    %v520 = vld [vmem:[%s1 + $0x30c] sm:$0xff]
    %v521 = vld [vmem:[%s1 + $0x314] sm:$0xf]
    %v632 = vunpack.c.l.b16 %v412
    %v633 = vunpack.c.h.b16 %v412
    %v634 = vunpack.c.l.b16 %v413
    %v635 = vunpack.c.h.b16 %v413
    %v636 = vunpack.c.l.b16 %v414
    %v637 = vunpack.c.h.b16 %v414
    %v638 = vunpack.c.l.b16 %v415
    %v639 = vunpack.c.h.b16 %v415
    %v640 = vunpack.c.l.b16 %v416
    %v641 = vunpack.c.l.b16 %v417
    %v642 = vunpack.c.h.b16 %v417
    %v643 = vunpack.c.l.b16 %v418
    %v644 = vunpack.c.h.b16 %v418
    %v645 = vunpack.c.l.b16 %v419
    %v646 = vunpack.c.h.b16 %v419
    %v647 = vunpack.c.l.b16 %v420
    %v648 = vunpack.c.h.b16 %v420
    %v649 = vunpack.c.l.b16 %v421
    %v650 = vunpack.c.l.b16 %v422
    %v651 = vunpack.c.h.b16 %v422
    %v652 = vunpack.c.l.b16 %v423
    %v653 = vunpack.c.h.b16 %v423
    %v654 = vunpack.c.l.b16 %v424
    %v655 = vunpack.c.h.b16 %v424
    %v656 = vunpack.c.l.b16 %v425
    %v657 = vunpack.c.h.b16 %v425
    %v658 = vunpack.c.l.b16 %v426
    %v659 = vunpack.c.l.b16 %v427
    %v660 = vunpack.c.h.b16 %v427
    %v661 = vunpack.c.l.b16 %v428
    %v662 = vunpack.c.h.b16 %v428
    %v663 = vunpack.c.l.b16 %v429
    %v664 = vunpack.c.h.b16 %v429
    %v665 = vunpack.c.l.b16 %v430
    %v666 = vunpack.c.h.b16 %v430
    %v667 = vunpack.c.l.b16 %v431
    %v668 = vunpack.c.l.b16 %v432
    %v669 = vunpack.c.h.b16 %v432
    %v670 = vunpack.c.l.b16 %v433
    %v671 = vunpack.c.h.b16 %v433
    %v672 = vunpack.c.l.b16 %v434
    %v673 = vunpack.c.h.b16 %v434
    %v674 = vunpack.c.l.b16 %v435
    %v675 = vunpack.c.h.b16 %v435
    %v676 = vunpack.c.l.b16 %v436
    %v677 = vunpack.c.l.b16 %v437
    %v678 = vunpack.c.h.b16 %v437
    %v679 = vunpack.c.l.b16 %v438
    %v680 = vunpack.c.h.b16 %v438
    %v681 = vunpack.c.l.b16 %v439
    %v682 = vunpack.c.h.b16 %v439
    %v683 = vunpack.c.l.b16 %v440
    %v684 = vunpack.c.h.b16 %v440
    %v685 = vunpack.c.l.b16 %v441
    %v686 = vunpack.c.l.b16 %v442
    %v687 = vunpack.c.h.b16 %v442
    %v688 = vunpack.c.l.b16 %v443
    %v689 = vunpack.c.h.b16 %v443
    %v690 = vunpack.c.l.b16 %v444
    %v691 = vunpack.c.h.b16 %v444
    %v692 = vunpack.c.l.b16 %v445
    %v693 = vunpack.c.h.b16 %v445
    %v694 = vunpack.c.l.b16 %v446
    %v695 = vunpack.c.l.b16 %v447
    %v696 = vunpack.c.h.b16 %v447
    %v697 = vunpack.c.l.b16 %v448
    %v698 = vunpack.c.h.b16 %v448
    %v699 = vunpack.c.l.b16 %v449
    %v700 = vunpack.c.h.b16 %v449
    %v701 = vunpack.c.l.b16 %v450
    %v702 = vunpack.c.h.b16 %v450
    %v703 = vunpack.c.l.b16 %v451
    %v704 = vunpack.c.l.b16 %v452
    %v705 = vunpack.c.h.b16 %v452
    %v706 = vunpack.c.l.b16 %v453
    %v707 = vunpack.c.h.b16 %v453
    %v708 = vunpack.c.l.b16 %v454
    %v709 = vunpack.c.h.b16 %v454
    %v710 = vunpack.c.l.b16 %v455
    %v711 = vunpack.c.h.b16 %v455
    %v712 = vunpack.c.l.b16 %v456
    %v713 = vunpack.c.l.b16 %v457
    %v714 = vunpack.c.h.b16 %v457
    %v715 = vunpack.c.l.b16 %v458
    %v716 = vunpack.c.h.b16 %v458
    %v717 = vunpack.c.l.b16 %v459
    %v718 = vunpack.c.h.b16 %v459
    %v719 = vunpack.c.l.b16 %v460
    %v720 = vunpack.c.h.b16 %v460
    %v721 = vunpack.c.l.b16 %v461
    %v722 = vunpack.c.l.b16 %v462
    %v723 = vunpack.c.h.b16 %v462
    %v724 = vunpack.c.l.b16 %v463
    %v725 = vunpack.c.h.b16 %v463
    %v726 = vunpack.c.l.b16 %v464
    %v727 = vunpack.c.h.b16 %v464
    %v728 = vunpack.c.l.b16 %v465
    %v729 = vunpack.c.h.b16 %v465
    %v730 = vunpack.c.l.b16 %v466
    %v731 = vunpack.c.l.b16 %v467
    %v732 = vunpack.c.h.b16 %v467
    %v733 = vunpack.c.l.b16 %v468
    %v734 = vunpack.c.h.b16 %v468
    %v735 = vunpack.c.l.b16 %v469
    %v736 = vunpack.c.h.b16 %v469
    %v737 = vunpack.c.l.b16 %v470
    %v738 = vunpack.c.h.b16 %v470
    %v739 = vunpack.c.l.b16 %v471
    %v740 = vunpack.c.l.b16 %v472
    %v741 = vunpack.c.h.b16 %v472
    %v742 = vunpack.c.l.b16 %v473
    %v743 = vunpack.c.h.b16 %v473
    %v744 = vunpack.c.l.b16 %v474
    %v745 = vunpack.c.h.b16 %v474
    %v746 = vunpack.c.l.b16 %v475
    %v747 = vunpack.c.h.b16 %v475
    %v748 = vunpack.c.l.b16 %v476
    %v749 = vunpack.c.l.b16 %v477
    %v750 = vunpack.c.h.b16 %v477
    %v751 = vunpack.c.l.b16 %v478
    %v752 = vunpack.c.h.b16 %v478
    %v753 = vunpack.c.l.b16 %v479
    %v754 = vunpack.c.h.b16 %v479
    %v755 = vunpack.c.l.b16 %v480
    %v756 = vunpack.c.h.b16 %v480
    %v757 = vunpack.c.l.b16 %v481
    %v758 = vunpack.c.l.b16 %v482
    %v759 = vunpack.c.h.b16 %v482
    %v760 = vunpack.c.l.b16 %v483
    %v761 = vunpack.c.h.b16 %v483
    %v762 = vunpack.c.l.b16 %v484
    %v763 = vunpack.c.h.b16 %v484
    %v764 = vunpack.c.l.b16 %v485
    %v765 = vunpack.c.h.b16 %v485
    %v766 = vunpack.c.l.b16 %v486
    %v767 = vunpack.c.l.b16 %v487
    %v768 = vunpack.c.h.b16 %v487
    %v769 = vunpack.c.l.b16 %v488
    %v770 = vunpack.c.h.b16 %v488
    %v771 = vunpack.c.l.b16 %v489
    %v772 = vunpack.c.h.b16 %v489
    %v773 = vunpack.c.l.b16 %v490
    %v774 = vunpack.c.h.b16 %v490
    %v775 = vunpack.c.l.b16 %v491
    %v776 = vunpack.c.l.b16 %v492
    %v777 = vunpack.c.h.b16 %v492
    %v778 = vunpack.c.l.b16 %v493
    %v779 = vunpack.c.h.b16 %v493
    %v780 = vunpack.c.l.b16 %v494
    %v781 = vunpack.c.h.b16 %v494
    %v782 = vunpack.c.l.b16 %v495
    %v783 = vunpack.c.h.b16 %v495
    %v784 = vunpack.c.l.b16 %v496
    %v785 = vunpack.c.l.b16 %v497
    %v786 = vunpack.c.h.b16 %v497
    %v787 = vunpack.c.l.b16 %v498
    %v788 = vunpack.c.h.b16 %v498
    %v789 = vunpack.c.l.b16 %v499
    %v790 = vunpack.c.h.b16 %v499
    %v791 = vunpack.c.l.b16 %v500
    %v792 = vunpack.c.h.b16 %v500
    %v793 = vunpack.c.l.b16 %v501
    %v794 = vunpack.c.l.b16 %v502
    %v795 = vunpack.c.h.b16 %v502
    %v796 = vunpack.c.l.b16 %v503
    %v797 = vunpack.c.h.b16 %v503
    %v798 = vunpack.c.l.b16 %v504
    %v799 = vunpack.c.h.b16 %v504
    %v800 = vunpack.c.l.b16 %v505
    %v801 = vunpack.c.h.b16 %v505
    %v802 = vunpack.c.l.b16 %v506
    %v803 = vunpack.c.l.b16 %v507
    %v804 = vunpack.c.h.b16 %v507
    %v805 = vunpack.c.l.b16 %v508
    %v806 = vunpack.c.h.b16 %v508
    %v807 = vunpack.c.l.b16 %v509
    %v808 = vunpack.c.h.b16 %v509
    %v809 = vunpack.c.l.b16 %v510
    %v810 = vunpack.c.h.b16 %v510
    %v811 = vunpack.c.l.b16 %v511
    %v812 = vunpack.c.l.b16 %v512
    %v813 = vunpack.c.h.b16 %v512
    %v814 = vunpack.c.l.b16 %v513
    %v815 = vunpack.c.h.b16 %v513
    %v816 = vunpack.c.l.b16 %v514
    %v817 = vunpack.c.h.b16 %v514
    %v818 = vunpack.c.l.b16 %v515
    %v819 = vunpack.c.h.b16 %v515
    %v820 = vunpack.c.l.b16 %v516
    %v821 = vunpack.c.l.b16 %v517
    %v822 = vunpack.c.h.b16 %v517
    %v823 = vunpack.c.l.b16 %v518
    %v824 = vunpack.c.h.b16 %v518
    %v825 = vunpack.c.l.b16 %v519
    %v826 = vunpack.c.h.b16 %v519
    %v827 = vunpack.c.l.b16 %v520
    %v828 = vunpack.c.h.b16 %v520
    %v829 = vunpack.c.l.b16 %v521
    %v830 = vpack.c.b16 %v641, %v632
    %v831 = vpack.c.b16 %v642, %v633
    %v832 = vpack.c.b16 %v643, %v634
    %v833 = vpack.c.b16 %v644, %v635
    %v834 = vpack.c.b16 %v645, %v636
    %v835 = vpack.c.b16 %v646, %v637
    %v836 = vpack.c.b16 %v647, %v638
    %v837 = vpack.c.b16 %v648, %v639
    %v838 = vpack.c.b16 %v649, %v640
    %v839 = vpack.c.b16 %v659, %v650
    %v840 = vpack.c.b16 %v660, %v651
    %v841 = vpack.c.b16 %v661, %v652
    %v842 = vpack.c.b16 %v662, %v653
    %v843 = vpack.c.b16 %v663, %v654
    %v844 = vpack.c.b16 %v664, %v655
    %v845 = vpack.c.b16 %v665, %v656
    %v846 = vpack.c.b16 %v666, %v657
    %v847 = vpack.c.b16 %v667, %v658
    %v848 = vpack.c.b16 %v677, %v668
    %v849 = vpack.c.b16 %v678, %v669
    %v850 = vpack.c.b16 %v679, %v670
    %v851 = vpack.c.b16 %v680, %v671
    %v852 = vpack.c.b16 %v681, %v672
    %v853 = vpack.c.b16 %v682, %v673
    %v854 = vpack.c.b16 %v683, %v674
    %v855 = vpack.c.b16 %v684, %v675
    %v856 = vpack.c.b16 %v685, %v676
    %v857 = vpack.c.b16 %v695, %v686
    %v858 = vpack.c.b16 %v696, %v687
    %v859 = vpack.c.b16 %v697, %v688
    %v860 = vpack.c.b16 %v698, %v689
    %v861 = vpack.c.b16 %v699, %v690
    %v862 = vpack.c.b16 %v700, %v691
    %v863 = vpack.c.b16 %v701, %v692
    %v864 = vpack.c.b16 %v702, %v693
    %v865 = vpack.c.b16 %v703, %v694
    %v866 = vpack.c.b16 %v713, %v704
    %v867 = vpack.c.b16 %v714, %v705
    %v868 = vpack.c.b16 %v715, %v706
    %v869 = vpack.c.b16 %v716, %v707
    %v870 = vpack.c.b16 %v717, %v708
    %v871 = vpack.c.b16 %v718, %v709
    %v872 = vpack.c.b16 %v719, %v710
    %v873 = vpack.c.b16 %v720, %v711
    %v874 = vpack.c.b16 %v721, %v712
    %v875 = vpack.c.b16 %v731, %v722
    %v876 = vpack.c.b16 %v732, %v723
    %v877 = vpack.c.b16 %v733, %v724
    %v878 = vpack.c.b16 %v734, %v725
    %v879 = vpack.c.b16 %v735, %v726
    %v880 = vpack.c.b16 %v736, %v727
    %v881 = vpack.c.b16 %v737, %v728
    %v882 = vpack.c.b16 %v738, %v729
    %v883 = vpack.c.b16 %v739, %v730
    %v884 = vpack.c.b16 %v749, %v740
    %v885 = vpack.c.b16 %v750, %v741
    %v886 = vpack.c.b16 %v751, %v742
    %v887 = vpack.c.b16 %v752, %v743
    %v888 = vpack.c.b16 %v753, %v744
    %v889 = vpack.c.b16 %v754, %v745
    %v890 = vpack.c.b16 %v755, %v746
    %v891 = vpack.c.b16 %v756, %v747
    %v892 = vpack.c.b16 %v757, %v748
    %v893 = vpack.c.b16 %v767, %v758
    %v894 = vpack.c.b16 %v768, %v759
    %v895 = vpack.c.b16 %v769, %v760
    %v896 = vpack.c.b16 %v770, %v761
    %v897 = vpack.c.b16 %v771, %v762
    %v898 = vpack.c.b16 %v772, %v763
    %v899 = vpack.c.b16 %v773, %v764
    %v900 = vpack.c.b16 %v774, %v765
    %v901 = vpack.c.b16 %v775, %v766
    %v902 = vpack.c.b16 %v785, %v776
    %v903 = vpack.c.b16 %v786, %v777
    %v904 = vpack.c.b16 %v787, %v778
    %v905 = vpack.c.b16 %v788, %v779
    %v906 = vpack.c.b16 %v789, %v780
    %v907 = vpack.c.b16 %v790, %v781
    %v908 = vpack.c.b16 %v791, %v782
    %v909 = vpack.c.b16 %v792, %v783
    %v910 = vpack.c.b16 %v793, %v784
    %v911 = vpack.c.b16 %v803, %v794
    %v912 = vpack.c.b16 %v804, %v795
    %v913 = vpack.c.b16 %v805, %v796
    %v914 = vpack.c.b16 %v806, %v797
    %v915 = vpack.c.b16 %v807, %v798
    %v916 = vpack.c.b16 %v808, %v799
    %v917 = vpack.c.b16 %v809, %v800
    %v918 = vpack.c.b16 %v810, %v801
    %v919 = vpack.c.b16 %v811, %v802
    %v920 = vpack.c.b16 %v821, %v812
    %v921 = vpack.c.b16 %v822, %v813
    %v922 = vpack.c.b16 %v823, %v814
    %v923 = vpack.c.b16 %v824, %v815
    %v924 = vpack.c.b16 %v825, %v816
    %v925 = vpack.c.b16 %v826, %v817
    %v926 = vpack.c.b16 %v827, %v818
    %v927 = vpack.c.b16 %v828, %v819
    %v928 = vpack.c.b16 %v829, %v820
    %vm1017 = vcmask 261120
    %v1019 = vsel %vm1017, %v838, 0
    %v1022 = vsel %vm1017, %v847, 0
    %v1025 = vsel %vm1017, %v856, 0
    %v1028 = vsel %vm1017, %v865, 0
    %v1031 = vsel %vm1017, %v874, 0
    %v1034 = vsel %vm1017, %v883, 0
    %v1037 = vsel %vm1017, %v892, 0
    %v1040 = vsel %vm1017, %v901, 0
    %v1043 = vsel %vm1017, %v910, 0
    %v1046 = vsel %vm1017, %v919, 0
    %v1049 = vsel %vm1017, %v928, 0
    %1051 = vmatprep.subr.bf16.mxu0 %v281
    %1052 = vmatpush1.bf16.msra.mxu0 %v280
    %1053 = vmatprep.subr.bf16.mxu0 %v283
    %1054 = vmatpush1.bf16.msra.mxu0 %v282
    %1055 = vmatprep.subr.bf16.mxu0 %v285
    %1056 = vmatpush1.bf16.msra.mxu0 %v284
    %1057 = vmatprep.subr.bf16.mxu0 %v287
    %1058 = vmatpush1.bf16.msra.mxu0 %v286
    %1059 = vmatprep.subr.bf16.mxu0 %v289
    %1060 = vmatpush1.bf16.msra.mxu0 %v288
    %1061 = vmatprep.subr.bf16.mxu0 %v291
    %1062 = vmatpush1.bf16.msra.mxu0 %v290
    %1063 = vmatprep.subr.bf16.mxu0 %v293
    %1064 = vmatpush1.bf16.msra.mxu0 %v292
    %1065 = vmatprep.subr.bf16.mxu0 %v295
    %1066 = vmatpush1.bf16.msra.mxu0 %v294
    %1067 = vmatprep.subr.bf16.mxu0 %v297
    %1068 = vmatpush1.bf16.msra.mxu0 %v296
    %1069 = vmatprep.subr.bf16.mxu0 %v299
    %1070 = vmatpush1.bf16.msra.mxu0 %v298
    %1071 = vmatprep.subr.bf16.mxu0 %v301
    %1072 = vmatpush1.bf16.msra.mxu0 %v300
    %1073 = vmatprep.subr.bf16.mxu0 %v303
    %1074 = vmatpush1.bf16.msra.mxu0 %v302
    %1075 = vmatprep.subr.bf16.mxu0 %v305
    %1076 = vmatpush1.bf16.msra.mxu0 %v304
    %1077 = vmatprep.subr.bf16.mxu0 %v307
    %1078 = vmatpush1.bf16.msra.mxu0 %v306
    %1079 = vmatprep.subr.bf16.mxu0 %v309
    %1080 = vmatpush1.bf16.msra.mxu0 %v308
    %1081 = vmatprep.subr.bf16.mxu0 %v311
    %1082 = vmatpush1.bf16.msra.mxu0 %v310
    %1083 = vmatprep.mubr.bf16.mxu0 %v831
    %1084 = vmatmul.mubr.bf16.gmra.mrb[0].mxu0 %v830
    %v1085 = vpop.f32.mrb[0].mxu0
    %v1086 = vadd.f32 0.0, %v1085
    %v1087 = vpop.f32.mrb[0].mxu0
    %v1088 = vadd.f32 0.0, %v1087
    %v1089 = vpop.f32.mrb[0].mxu0
    %v1090 = vadd.f32 0.0, %v1089
    %v1091 = vpop.f32.mrb[0].mxu0
    %v1092 = vadd.f32 0.0, %v1091
    %1093 = vmatprep.mubr.bf16.mxu0 %v840
    %1094 = vmatmul.mubr.bf16.gmra.mrb[0].mxu0 %v839
    %v1095 = vpop.f32.mrb[0].mxu0
    %v1096 = vadd.f32 0.0, %v1095
    %v1097 = vpop.f32.mrb[0].mxu0
    %v1098 = vadd.f32 0.0, %v1097
    %v1099 = vpop.f32.mrb[0].mxu0
    %v1100 = vadd.f32 0.0, %v1099
    %v1101 = vpop.f32.mrb[0].mxu0
    %v1102 = vadd.f32 0.0, %v1101
    %1103 = vmatprep.mubr.bf16.mxu0 %v849
    %1104 = vmatmul.mubr.bf16.gmra.mrb[0].mxu0 %v848
    %v1105 = vpop.f32.mrb[0].mxu0
    %v1106 = vadd.f32 0.0, %v1105
    %v1107 = vpop.f32.mrb[0].mxu0
    %v1108 = vadd.f32 0.0, %v1107
    %v1109 = vpop.f32.mrb[0].mxu0
    %v1110 = vadd.f32 0.0, %v1109
    %v1111 = vpop.f32.mrb[0].mxu0
    %v1112 = vadd.f32 0.0, %v1111
    %1113 = vmatprep.mubr.bf16.mxu0 %v858
    %1114 = vmatmul.mubr.bf16.gmra.mrb[0].mxu0 %v857
    %v1115 = vpop.f32.mrb[0].mxu0
    %v1116 = vadd.f32 0.0, %v1115
    %v1117 = vpop.f32.mrb[0].mxu0
    %v1118 = vadd.f32 0.0, %v1117
    %v1119 = vpop.f32.mrb[0].mxu0
    %v1120 = vadd.f32 0.0, %v1119
    %v1121 = vpop.f32.mrb[0].mxu0
    %v1122 = vadd.f32 0.0, %v1121
    %1123 = vmatprep.mubr.bf16.mxu0 %v867
    %1124 = vmatmul.mubr.bf16.gmra.mrb[0].mxu0 %v866
    %v1125 = vpop.f32.mrb[0].mxu0
    %v1126 = vadd.f32 0.0, %v1125
    %v1127 = vpop.f32.mrb[0].mxu0
    %v1128 = vadd.f32 0.0, %v1127
    %v1129 = vpop.f32.mrb[0].mxu0
    %v1130 = vadd.f32 0.0, %v1129
    %v1131 = vpop.f32.mrb[0].mxu0
    %v1132 = vadd.f32 0.0, %v1131
    %1133 = vmatprep.mubr.bf16.mxu0 %v876
    %1134 = vmatmul.mubr.bf16.gmra.mrb[0].mxu0 %v875
    %v1135 = vpop.f32.mrb[0].mxu0
    %v1136 = vadd.f32 0.0, %v1135
    %v1137 = vpop.f32.mrb[0].mxu0
    %v1138 = vadd.f32 0.0, %v1137
    %v1139 = vpop.f32.mrb[0].mxu0
    %v1140 = vadd.f32 0.0, %v1139
    %v1141 = vpop.f32.mrb[0].mxu0
    %v1142 = vadd.f32 0.0, %v1141
    %1143 = vmatprep.mubr.bf16.mxu0 %v885
    %1144 = vmatmul.mubr.bf16.gmra.mrb[0].mxu0 %v884
    %v1145 = vpop.f32.mrb[0].mxu0
    %v1146 = vadd.f32 0.0, %v1145
    %v1147 = vpop.f32.mrb[0].mxu0
    %v1148 = vadd.f32 0.0, %v1147
    %v1149 = vpop.f32.mrb[0].mxu0
    %v1150 = vadd.f32 0.0, %v1149
    %v1151 = vpop.f32.mrb[0].mxu0
    %v1152 = vadd.f32 0.0, %v1151
    %1153 = vmatprep.mubr.bf16.mxu0 %v894
    %1154 = vmatmul.mubr.bf16.gmra.mrb[0].mxu0 %v893
    %v1155 = vpop.f32.mrb[0].mxu0
    %v1156 = vadd.f32 0.0, %v1155
    %v1157 = vpop.f32.mrb[0].mxu0
    %v1158 = vadd.f32 0.0, %v1157
    %v1159 = vpop.f32.mrb[0].mxu0
    %v1160 = vadd.f32 0.0, %v1159
    %v1161 = vpop.f32.mrb[0].mxu0
    %v1162 = vadd.f32 0.0, %v1161
    %1163 = vmatprep.mubr.bf16.mxu0 %v903
    %1164 = vmatmul.mubr.bf16.gmra.mrb[0].mxu0 %v902
    %v1165 = vpop.f32.mrb[0].mxu0
    %v1166 = vadd.f32 0.0, %v1165
    %v1167 = vpop.f32.mrb[0].mxu0
    %v1168 = vadd.f32 0.0, %v1167
    %v1169 = vpop.f32.mrb[0].mxu0
    %v1170 = vadd.f32 0.0, %v1169
    %v1171 = vpop.f32.mrb[0].mxu0
    %v1172 = vadd.f32 0.0, %v1171
    %1173 = vmatprep.mubr.bf16.mxu0 %v912
    %1174 = vmatmul.mubr.bf16.gmra.mrb[0].mxu0 %v911
    %v1175 = vpop.f32.mrb[0].mxu0
    %v1176 = vadd.f32 0.0, %v1175
    %v1177 = vpop.f32.mrb[0].mxu0
    %v1178 = vadd.f32 0.0, %v1177
    %v1179 = vpop.f32.mrb[0].mxu0
    %v1180 = vadd.f32 0.0, %v1179
    %v1181 = vpop.f32.mrb[0].mxu0
    %v1182 = vadd.f32 0.0, %v1181
    %1183 = vmatprep.mubr.bf16.mxu0 %v921
    %1184 = vmatmul.mubr.bf16.gmra.mrb[0].mxu0 %v920
    %v1185 = vpop.f32.mrb[0].mxu0
    %v1186 = vadd.f32 0.0, %v1185
    %v1187 = vpop.f32.mrb[0].mxu0
    %v1188 = vadd.f32 0.0, %v1187
    %v1189 = vpop.f32.mrb[0].mxu0
    %v1190 = vadd.f32 0.0, %v1189
    %v1191 = vpop.f32.mrb[0].mxu0
    %v1192 = vadd.f32 0.0, %v1191
    %1193 = vdwg.mxu0
    %1194 = vmatprep.subr.bf16.mxu0 %v313
    %1195 = vmatpush1.bf16.msra.mxu0 %v312
    %1196 = vmatprep.subr.bf16.mxu0 %v315
    %1197 = vmatpush1.bf16.msra.mxu0 %v314
    %1198 = vmatprep.subr.bf16.mxu0 %v317
    %1199 = vmatpush1.bf16.msra.mxu0 %v316
    %1200 = vmatprep.subr.bf16.mxu0 %v319
    %1201 = vmatpush1.bf16.msra.mxu0 %v318
    %1202 = vmatprep.subr.bf16.mxu0 %v321
    %1203 = vmatpush1.bf16.msra.mxu0 %v320
    %1204 = vmatprep.subr.bf16.mxu0 %v323
    %1205 = vmatpush1.bf16.msra.mxu0 %v322
    %1206 = vmatprep.subr.bf16.mxu0 %v325
    %1207 = vmatpush1.bf16.msra.mxu0 %v324
    %1208 = vmatprep.subr.bf16.mxu0 %v327
    %1209 = vmatpush1.bf16.msra.mxu0 %v326
    %1210 = vmatprep.subr.bf16.mxu0 %v329
    %1211 = vmatpush1.bf16.msra.mxu0 %v328
    %1212 = vmatprep.subr.bf16.mxu0 %v331
    %1213 = vmatpush1.bf16.msra.mxu0 %v330
    %1214 = vmatprep.subr.bf16.mxu0 %v333
    %1215 = vmatpush1.bf16.msra.mxu0 %v332
    %1216 = vmatprep.subr.bf16.mxu0 %v335
    %1217 = vmatpush1.bf16.msra.mxu0 %v334
    %1218 = vmatprep.subr.bf16.mxu0 %v337
    %1219 = vmatpush1.bf16.msra.mxu0 %v336
    %1220 = vmatprep.subr.bf16.mxu0 %v339
    %1221 = vmatpush1.bf16.msra.mxu0 %v338
    %1222 = vmatprep.subr.bf16.mxu0 %v341
    %1223 = vmatpush1.bf16.msra.mxu0 %v340
    %1224 = vmatprep.subr.bf16.mxu0 %v343
    %1225 = vmatpush1.bf16.msra.mxu0 %v342
    %1226 = vmatprep.mubr.bf16.mxu0 %v833
    %1227 = vmatmul.mubr.bf16.gmra.mrb[0].mxu0 %v832
    %v1228 = vpop.f32.mrb[0].mxu0
    %v1229 = vadd.f32 %v1086, %v1228
    %v1230 = vpop.f32.mrb[0].mxu0
    %v1231 = vadd.f32 %v1088, %v1230
    %v1232 = vpop.f32.mrb[0].mxu0
    %v1233 = vadd.f32 %v1090, %v1232
    %v1234 = vpop.f32.mrb[0].mxu0
    %v1235 = vadd.f32 %v1092, %v1234
    %1236 = vmatprep.mubr.bf16.mxu0 %v842
    %1237 = vmatmul.mubr.bf16.gmra.mrb[0].mxu0 %v841
    %v1238 = vpop.f32.mrb[0].mxu0
    %v1239 = vadd.f32 %v1096, %v1238
    %v1240 = vpop.f32.mrb[0].mxu0
    %v1241 = vadd.f32 %v1098, %v1240
    %v1242 = vpop.f32.mrb[0].mxu0
    %v1243 = vadd.f32 %v1100, %v1242
    %v1244 = vpop.f32.mrb[0].mxu0
    %v1245 = vadd.f32 %v1102, %v1244
    %1246 = vmatprep.mubr.bf16.mxu0 %v851
    %1247 = vmatmul.mubr.bf16.gmra.mrb[0].mxu0 %v850
    %v1248 = vpop.f32.mrb[0].mxu0
    %v1249 = vadd.f32 %v1106, %v1248
    %v1250 = vpop.f32.mrb[0].mxu0
    %v1251 = vadd.f32 %v1108, %v1250
    %v1252 = vpop.f32.mrb[0].mxu0
    %v1253 = vadd.f32 %v1110, %v1252
    %v1254 = vpop.f32.mrb[0].mxu0
    %v1255 = vadd.f32 %v1112, %v1254
    %1256 = vmatprep.mubr.bf16.mxu0 %v860
    %1257 = vmatmul.mubr.bf16.gmra.mrb[0].mxu0 %v859
    %v1258 = vpop.f32.mrb[0].mxu0
    %v1259 = vadd.f32 %v1116, %v1258
    %v1260 = vpop.f32.mrb[0].mxu0
    %v1261 = vadd.f32 %v1118, %v1260
    %v1262 = vpop.f32.mrb[0].mxu0
    %v1263 = vadd.f32 %v1120, %v1262
    %v1264 = vpop.f32.mrb[0].mxu0
    %v1265 = vadd.f32 %v1122, %v1264
    %1266 = vmatprep.mubr.bf16.mxu0 %v869
    %1267 = vmatmul.mubr.bf16.gmra.mrb[0].mxu0 %v868
    %v1268 = vpop.f32.mrb[0].mxu0
    %v1269 = vadd.f32 %v1126, %v1268
    %v1270 = vpop.f32.mrb[0].mxu0
    %v1271 = vadd.f32 %v1128, %v1270
    %v1272 = vpop.f32.mrb[0].mxu0
    %v1273 = vadd.f32 %v1130, %v1272
    %v1274 = vpop.f32.mrb[0].mxu0
    %v1275 = vadd.f32 %v1132, %v1274
    %1276 = vmatprep.mubr.bf16.mxu0 %v878
    %1277 = vmatmul.mubr.bf16.gmra.mrb[0].mxu0 %v877
    %v1278 = vpop.f32.mrb[0].mxu0
    %v1279 = vadd.f32 %v1136, %v1278
    %v1280 = vpop.f32.mrb[0].mxu0
    %v1281 = vadd.f32 %v1138, %v1280
    %v1282 = vpop.f32.mrb[0].mxu0
    %v1283 = vadd.f32 %v1140, %v1282
    %v1284 = vpop.f32.mrb[0].mxu0
    %v1285 = vadd.f32 %v1142, %v1284
    %1286 = vmatprep.mubr.bf16.mxu0 %v887
    %1287 = vmatmul.mubr.bf16.gmra.mrb[0].mxu0 %v886
    %v1288 = vpop.f32.mrb[0].mxu0
    %v1289 = vadd.f32 %v1146, %v1288
    %v1290 = vpop.f32.mrb[0].mxu0
    %v1291 = vadd.f32 %v1148, %v1290
    %v1292 = vpop.f32.mrb[0].mxu0
    %v1293 = vadd.f32 %v1150, %v1292
    %v1294 = vpop.f32.mrb[0].mxu0
    %v1295 = vadd.f32 %v1152, %v1294
    %1296 = vmatprep.mubr.bf16.mxu0 %v896
    %1297 = vmatmul.mubr.bf16.gmra.mrb[0].mxu0 %v895
    %v1298 = vpop.f32.mrb[0].mxu0
    %v1299 = vadd.f32 %v1156, %v1298
    %v1300 = vpop.f32.mrb[0].mxu0
    %v1301 = vadd.f32 %v1158, %v1300
    %v1302 = vpop.f32.mrb[0].mxu0
    %v1303 = vadd.f32 %v1160, %v1302
    %v1304 = vpop.f32.mrb[0].mxu0
    %v1305 = vadd.f32 %v1162, %v1304
    %1306 = vmatprep.mubr.bf16.mxu0 %v905
    %1307 = vmatmul.mubr.bf16.gmra.mrb[0].mxu0 %v904
    %v1308 = vpop.f32.mrb[0].mxu0
    %v1309 = vadd.f32 %v1166, %v1308
    %v1310 = vpop.f32.mrb[0].mxu0
    %v1311 = vadd.f32 %v1168, %v1310
    %v1312 = vpop.f32.mrb[0].mxu0
    %v1313 = vadd.f32 %v1170, %v1312
    %v1314 = vpop.f32.mrb[0].mxu0
    %v1315 = vadd.f32 %v1172, %v1314
    %1316 = vmatprep.mubr.bf16.mxu0 %v914
    %1317 = vmatmul.mubr.bf16.gmra.mrb[0].mxu0 %v913
    %v1318 = vpop.f32.mrb[0].mxu0
    %v1319 = vadd.f32 %v1176, %v1318
    %v1320 = vpop.f32.mrb[0].mxu0
    %v1321 = vadd.f32 %v1178, %v1320
    %v1322 = vpop.f32.mrb[0].mxu0
    %v1323 = vadd.f32 %v1180, %v1322
    %v1324 = vpop.f32.mrb[0].mxu0
    %v1325 = vadd.f32 %v1182, %v1324
    %1326 = vmatprep.mubr.bf16.mxu0 %v923
    %1327 = vmatmul.mubr.bf16.gmra.mrb[0].mxu0 %v922
    %v1328 = vpop.f32.mrb[0].mxu0
    %v1329 = vadd.f32 %v1186, %v1328
    %v1330 = vpop.f32.mrb[0].mxu0
    %v1331 = vadd.f32 %v1188, %v1330
    %v1332 = vpop.f32.mrb[0].mxu0
    %v1333 = vadd.f32 %v1190, %v1332
    %v1334 = vpop.f32.mrb[0].mxu0
    %v1335 = vadd.f32 %v1192, %v1334
    %1336 = vdwg.mxu0
    %1337 = vmatprep.subr.bf16.mxu0 %v345
    %1338 = vmatpush1.bf16.msra.mxu0 %v344
    %1339 = vmatprep.subr.bf16.mxu0 %v347
    %1340 = vmatpush1.bf16.msra.mxu0 %v346
    %1341 = vmatprep.subr.bf16.mxu0 %v349
    %1342 = vmatpush1.bf16.msra.mxu0 %v348
    %1343 = vmatprep.subr.bf16.mxu0 %v351
    %1344 = vmatpush1.bf16.msra.mxu0 %v350
    %1345 = vmatprep.subr.bf16.mxu0 %v353
    %1346 = vmatpush1.bf16.msra.mxu0 %v352
    %1347 = vmatprep.subr.bf16.mxu0 %v355
    %1348 = vmatpush1.bf16.msra.mxu0 %v354
    %1349 = vmatprep.subr.bf16.mxu0 %v357
    %1350 = vmatpush1.bf16.msra.mxu0 %v356
    %1351 = vmatprep.subr.bf16.mxu0 %v359
    %1352 = vmatpush1.bf16.msra.mxu0 %v358
    %1353 = vmatprep.subr.bf16.mxu0 %v361
    %1354 = vmatpush1.bf16.msra.mxu0 %v360
    %1355 = vmatprep.subr.bf16.mxu0 %v363
    %1356 = vmatpush1.bf16.msra.mxu0 %v362
    %1357 = vmatprep.subr.bf16.mxu0 %v365
    %1358 = vmatpush1.bf16.msra.mxu0 %v364
    %1359 = vmatprep.subr.bf16.mxu0 %v367
    %1360 = vmatpush1.bf16.msra.mxu0 %v366
    %1361 = vmatprep.subr.bf16.mxu0 %v369
    %1362 = vmatpush1.bf16.msra.mxu0 %v368
    %1363 = vmatprep.subr.bf16.mxu0 %v371
    %1364 = vmatpush1.bf16.msra.mxu0 %v370
    %1365 = vmatprep.subr.bf16.mxu0 %v373
    %1366 = vmatpush1.bf16.msra.mxu0 %v372
    %1367 = vmatprep.subr.bf16.mxu0 %v375
    %1368 = vmatpush1.bf16.msra.mxu0 %v374
    %1369 = vmatprep.mubr.bf16.mxu0 %v835
    %1370 = vmatmul.mubr.bf16.gmra.mrb[0].mxu0 %v834
    %v1371 = vpop.f32.mrb[0].mxu0
    %v1372 = vadd.f32 %v1229, %v1371
    %v1373 = vpop.f32.mrb[0].mxu0
    %v1374 = vadd.f32 %v1231, %v1373
    %v1375 = vpop.f32.mrb[0].mxu0
    %v1376 = vadd.f32 %v1233, %v1375
    %v1377 = vpop.f32.mrb[0].mxu0
    %v1378 = vadd.f32 %v1235, %v1377
    %1379 = vmatprep.mubr.bf16.mxu0 %v844
    %1380 = vmatmul.mubr.bf16.gmra.mrb[0].mxu0 %v843
    %v1381 = vpop.f32.mrb[0].mxu0
    %v1382 = vadd.f32 %v1239, %v1381
    %v1383 = vpop.f32.mrb[0].mxu0
    %v1384 = vadd.f32 %v1241, %v1383
    %v1385 = vpop.f32.mrb[0].mxu0
    %v1386 = vadd.f32 %v1243, %v1385
    %v1387 = vpop.f32.mrb[0].mxu0
    %v1388 = vadd.f32 %v1245, %v1387
    %1389 = vmatprep.mubr.bf16.mxu0 %v853
    %1390 = vmatmul.mubr.bf16.gmra.mrb[0].mxu0 %v852
    %v1391 = vpop.f32.mrb[0].mxu0
    %v1392 = vadd.f32 %v1249, %v1391
    %v1393 = vpop.f32.mrb[0].mxu0
    %v1394 = vadd.f32 %v1251, %v1393
    %v1395 = vpop.f32.mrb[0].mxu0
    %v1396 = vadd.f32 %v1253, %v1395
    %v1397 = vpop.f32.mrb[0].mxu0
    %v1398 = vadd.f32 %v1255, %v1397
    %1399 = vmatprep.mubr.bf16.mxu0 %v862
    %1400 = vmatmul.mubr.bf16.gmra.mrb[0].mxu0 %v861
    %v1401 = vpop.f32.mrb[0].mxu0
    %v1402 = vadd.f32 %v1259, %v1401
    %v1403 = vpop.f32.mrb[0].mxu0
    %v1404 = vadd.f32 %v1261, %v1403
    %v1405 = vpop.f32.mrb[0].mxu0
    %v1406 = vadd.f32 %v1263, %v1405
    %v1407 = vpop.f32.mrb[0].mxu0
    %v1408 = vadd.f32 %v1265, %v1407
    %1409 = vmatprep.mubr.bf16.mxu0 %v871
    %1410 = vmatmul.mubr.bf16.gmra.mrb[0].mxu0 %v870
    %v1411 = vpop.f32.mrb[0].mxu0
    %v1412 = vadd.f32 %v1269, %v1411
    %v1413 = vpop.f32.mrb[0].mxu0
    %v1414 = vadd.f32 %v1271, %v1413
    %v1415 = vpop.f32.mrb[0].mxu0
    %v1416 = vadd.f32 %v1273, %v1415
    %v1417 = vpop.f32.mrb[0].mxu0
    %v1418 = vadd.f32 %v1275, %v1417
    %1419 = vmatprep.mubr.bf16.mxu0 %v880
    %1420 = vmatmul.mubr.bf16.gmra.mrb[0].mxu0 %v879
    %v1421 = vpop.f32.mrb[0].mxu0
    %v1422 = vadd.f32 %v1279, %v1421
    %v1423 = vpop.f32.mrb[0].mxu0
    %v1424 = vadd.f32 %v1281, %v1423
    %v1425 = vpop.f32.mrb[0].mxu0
    %v1426 = vadd.f32 %v1283, %v1425
    %v1427 = vpop.f32.mrb[0].mxu0
    %v1428 = vadd.f32 %v1285, %v1427
    %1429 = vmatprep.mubr.bf16.mxu0 %v889
    %1430 = vmatmul.mubr.bf16.gmra.mrb[0].mxu0 %v888
    %v1431 = vpop.f32.mrb[0].mxu0
    %v1432 = vadd.f32 %v1289, %v1431
    %v1433 = vpop.f32.mrb[0].mxu0
    %v1434 = vadd.f32 %v1291, %v1433
    %v1435 = vpop.f32.mrb[0].mxu0
    %v1436 = vadd.f32 %v1293, %v1435
    %v1437 = vpop.f32.mrb[0].mxu0
    %v1438 = vadd.f32 %v1295, %v1437
    %1439 = vmatprep.mubr.bf16.mxu0 %v898
    %1440 = vmatmul.mubr.bf16.gmra.mrb[0].mxu0 %v897
    %v1441 = vpop.f32.mrb[0].mxu0
    %v1442 = vadd.f32 %v1299, %v1441
    %v1443 = vpop.f32.mrb[0].mxu0
    %v1444 = vadd.f32 %v1301, %v1443
    %v1445 = vpop.f32.mrb[0].mxu0
    %v1446 = vadd.f32 %v1303, %v1445
    %v1447 = vpop.f32.mrb[0].mxu0
    %v1448 = vadd.f32 %v1305, %v1447
    %1449 = vmatprep.mubr.bf16.mxu0 %v907
    %1450 = vmatmul.mubr.bf16.gmra.mrb[0].mxu0 %v906
    %v1451 = vpop.f32.mrb[0].mxu0
    %v1452 = vadd.f32 %v1309, %v1451
    %v1453 = vpop.f32.mrb[0].mxu0
    %v1454 = vadd.f32 %v1311, %v1453
    %v1455 = vpop.f32.mrb[0].mxu0
    %v1456 = vadd.f32 %v1313, %v1455
    %v1457 = vpop.f32.mrb[0].mxu0
    %v1458 = vadd.f32 %v1315, %v1457
    %1459 = vmatprep.mubr.bf16.mxu0 %v916
    %1460 = vmatmul.mubr.bf16.gmra.mrb[0].mxu0 %v915
    %v1461 = vpop.f32.mrb[0].mxu0
    %v1462 = vadd.f32 %v1319, %v1461
    %v1463 = vpop.f32.mrb[0].mxu0
    %v1464 = vadd.f32 %v1321, %v1463
    %v1465 = vpop.f32.mrb[0].mxu0
    %v1466 = vadd.f32 %v1323, %v1465
    %v1467 = vpop.f32.mrb[0].mxu0
    %v1468 = vadd.f32 %v1325, %v1467
    %1469 = vmatprep.mubr.bf16.mxu0 %v925
    %1470 = vmatmul.mubr.bf16.gmra.mrb[0].mxu0 %v924
    %v1471 = vpop.f32.mrb[0].mxu0
    %v1472 = vadd.f32 %v1329, %v1471
    %v1473 = vpop.f32.mrb[0].mxu0
    %v1474 = vadd.f32 %v1331, %v1473
    %v1475 = vpop.f32.mrb[0].mxu0
    %v1476 = vadd.f32 %v1333, %v1475
    %v1477 = vpop.f32.mrb[0].mxu0
    %v1478 = vadd.f32 %v1335, %v1477
    %1479 = vdwg.mxu0
    %1480 = vmatprep.subr.bf16.mxu0 %v377
    %1481 = vmatpush1.bf16.msra.mxu0 %v376
    %1482 = vmatprep.subr.bf16.mxu0 %v379
    %1483 = vmatpush1.bf16.msra.mxu0 %v378
    %1484 = vmatprep.subr.bf16.mxu0 %v381
    %1485 = vmatpush1.bf16.msra.mxu0 %v380
    %1486 = vmatprep.subr.bf16.mxu0 %v383
    %1487 = vmatpush1.bf16.msra.mxu0 %v382
    %1488 = vmatprep.subr.bf16.mxu0 %v385
    %1489 = vmatpush1.bf16.msra.mxu0 %v384
    %1490 = vmatprep.subr.bf16.mxu0 %v387
    %1491 = vmatpush1.bf16.msra.mxu0 %v386
    %1492 = vmatprep.subr.bf16.mxu0 %v389
    %1493 = vmatpush1.bf16.msra.mxu0 %v388
    %1494 = vmatprep.subr.bf16.mxu0 %v391
    %1495 = vmatpush1.bf16.msra.mxu0 %v390
    %1496 = vmatprep.subr.bf16.mxu0 %v393
    %1497 = vmatpush1.bf16.msra.mxu0 %v392
    %1498 = vmatprep.subr.bf16.mxu0 %v395
    %1499 = vmatpush1.bf16.msra.mxu0 %v394
    %1500 = vmatprep.subr.bf16.mxu0 %v397
    %1501 = vmatpush1.bf16.msra.mxu0 %v396
    %1502 = vmatprep.subr.bf16.mxu0 %v399
    %1503 = vmatpush1.bf16.msra.mxu0 %v398
    %1504 = vmatprep.subr.bf16.mxu0 %v401
    %1505 = vmatpush1.bf16.msra.mxu0 %v400
    %1506 = vmatprep.subr.bf16.mxu0 %v403
    %1507 = vmatpush1.bf16.msra.mxu0 %v402
    %1508 = vmatprep.subr.bf16.mxu0 %v405
    %1509 = vmatpush1.bf16.msra.mxu0 %v404
    %1510 = vmatprep.subr.bf16.mxu0 %v407
    %1511 = vmatpush1.bf16.msra.mxu0 %v406
    %1512 = vmatprep.mubr.bf16.mxu0 %v837
    %1513 = vmatmul.mubr.bf16.gmra.mrb[0].mxu0 %v836
    %v1514 = vpop.f32.mrb[0].mxu0
    %v1515 = vadd.f32 %v1372, %v1514
    %v1516 = vpop.f32.mrb[0].mxu0
    %v1517 = vadd.f32 %v1374, %v1516
    %v1518 = vpop.f32.mrb[0].mxu0
    %v1519 = vadd.f32 %v1376, %v1518
    %v1520 = vpop.f32.mrb[0].mxu0
    %v1521 = vadd.f32 %v1378, %v1520
    %1522 = vmatprep.mubr.bf16.mxu0 %v846
    %1523 = vmatmul.mubr.bf16.gmra.mrb[0].mxu0 %v845
    %v1524 = vpop.f32.mrb[0].mxu0
    %v1525 = vadd.f32 %v1382, %v1524
    %v1526 = vpop.f32.mrb[0].mxu0
    %v1527 = vadd.f32 %v1384, %v1526
    %v1528 = vpop.f32.mrb[0].mxu0
    %v1529 = vadd.f32 %v1386, %v1528
    %v1530 = vpop.f32.mrb[0].mxu0
    %v1531 = vadd.f32 %v1388, %v1530
    %1532 = vmatprep.mubr.bf16.mxu0 %v855
    %1533 = vmatmul.mubr.bf16.gmra.mrb[0].mxu0 %v854
    %v1534 = vpop.f32.mrb[0].mxu0
    %v1535 = vadd.f32 %v1392, %v1534
    %v1536 = vpop.f32.mrb[0].mxu0
    %v1537 = vadd.f32 %v1394, %v1536
    %v1538 = vpop.f32.mrb[0].mxu0
    %v1539 = vadd.f32 %v1396, %v1538
    %v1540 = vpop.f32.mrb[0].mxu0
    %v1541 = vadd.f32 %v1398, %v1540
    %1542 = vmatprep.mubr.bf16.mxu0 %v864
    %1543 = vmatmul.mubr.bf16.gmra.mrb[0].mxu0 %v863
    %v1544 = vpop.f32.mrb[0].mxu0
    %v1545 = vadd.f32 %v1402, %v1544
    %v1546 = vpop.f32.mrb[0].mxu0
    %v1547 = vadd.f32 %v1404, %v1546
    %v1548 = vpop.f32.mrb[0].mxu0
    %v1549 = vadd.f32 %v1406, %v1548
    %v1550 = vpop.f32.mrb[0].mxu0
    %v1551 = vadd.f32 %v1408, %v1550
    %1552 = vmatprep.mubr.bf16.mxu0 %v873
    %1553 = vmatmul.mubr.bf16.gmra.mrb[0].mxu0 %v872
    %v1554 = vpop.f32.mrb[0].mxu0
    %v1555 = vadd.f32 %v1412, %v1554
    %v1556 = vpop.f32.mrb[0].mxu0
    %v1557 = vadd.f32 %v1414, %v1556
    %v1558 = vpop.f32.mrb[0].mxu0
    %v1559 = vadd.f32 %v1416, %v1558
    %v1560 = vpop.f32.mrb[0].mxu0
    %v1561 = vadd.f32 %v1418, %v1560
    %1562 = vmatprep.mubr.bf16.mxu0 %v882
    %1563 = vmatmul.mubr.bf16.gmra.mrb[0].mxu0 %v881
    %v1564 = vpop.f32.mrb[0].mxu0
    %v1565 = vadd.f32 %v1422, %v1564
    %v1566 = vpop.f32.mrb[0].mxu0
    %v1567 = vadd.f32 %v1424, %v1566
    %v1568 = vpop.f32.mrb[0].mxu0
    %v1569 = vadd.f32 %v1426, %v1568
    %v1570 = vpop.f32.mrb[0].mxu0
    %v1571 = vadd.f32 %v1428, %v1570
    %1572 = vmatprep.mubr.bf16.mxu0 %v891
    %1573 = vmatmul.mubr.bf16.gmra.mrb[0].mxu0 %v890
    %v1574 = vpop.f32.mrb[0].mxu0
    %v1575 = vadd.f32 %v1432, %v1574
    %v1576 = vpop.f32.mrb[0].mxu0
    %v1577 = vadd.f32 %v1434, %v1576
    %v1578 = vpop.f32.mrb[0].mxu0
    %v1579 = vadd.f32 %v1436, %v1578
    %v1580 = vpop.f32.mrb[0].mxu0
    %v1581 = vadd.f32 %v1438, %v1580
    %1582 = vmatprep.mubr.bf16.mxu0 %v900
    %1583 = vmatmul.mubr.bf16.gmra.mrb[0].mxu0 %v899
    %v1584 = vpop.f32.mrb[0].mxu0
    %v1585 = vadd.f32 %v1442, %v1584
    %v1586 = vpop.f32.mrb[0].mxu0
    %v1587 = vadd.f32 %v1444, %v1586
    %v1588 = vpop.f32.mrb[0].mxu0
    %v1589 = vadd.f32 %v1446, %v1588
    %v1590 = vpop.f32.mrb[0].mxu0
    %v1591 = vadd.f32 %v1448, %v1590
    %1592 = vmatprep.mubr.bf16.mxu0 %v909
    %1593 = vmatmul.mubr.bf16.gmra.mrb[0].mxu0 %v908
    %v1594 = vpop.f32.mrb[0].mxu0
    %v1595 = vadd.f32 %v1452, %v1594
    %v1596 = vpop.f32.mrb[0].mxu0
    %v1597 = vadd.f32 %v1454, %v1596
    %v1598 = vpop.f32.mrb[0].mxu0
    %v1599 = vadd.f32 %v1456, %v1598
    %v1600 = vpop.f32.mrb[0].mxu0
    %v1601 = vadd.f32 %v1458, %v1600
    %1602 = vmatprep.mubr.bf16.mxu0 %v918
    %1603 = vmatmul.mubr.bf16.gmra.mrb[0].mxu0 %v917
    %v1604 = vpop.f32.mrb[0].mxu0
    %v1605 = vadd.f32 %v1462, %v1604
    %v1606 = vpop.f32.mrb[0].mxu0
    %v1607 = vadd.f32 %v1464, %v1606
    %v1608 = vpop.f32.mrb[0].mxu0
    %v1609 = vadd.f32 %v1466, %v1608
    %v1610 = vpop.f32.mrb[0].mxu0
    %v1611 = vadd.f32 %v1468, %v1610
    %1612 = vmatprep.mubr.bf16.mxu0 %v927
    %1613 = vmatmul.mubr.bf16.gmra.mrb[0].mxu0 %v926
    %v1614 = vpop.f32.mrb[0].mxu0
    %v1615 = vadd.f32 %v1472, %v1614
    %v1616 = vpop.f32.mrb[0].mxu0
    %v1617 = vadd.f32 %v1474, %v1616
    %v1618 = vpop.f32.mrb[0].mxu0
    %v1619 = vadd.f32 %v1476, %v1618
    %v1620 = vpop.f32.mrb[0].mxu0
    %v1621 = vadd.f32 %v1478, %v1620
    %1622 = vdwg.mxu0
    %1623 = vmatprep.subr.bf16.mxu0 %v409
    %1624 = vmatpush1.bf16.msra.mxu0 %v408
    %1625 = vmatprep.subr.bf16.mxu0 %v411
    %1626 = vmatpush1.bf16.msra.mxu0 %v410
    %1627 = vmatprep.subr.bf16.mxu0 0
    %1628 = vmatpush1.bf16.msra.mxu0 0
    %1629 = vmatprep.subr.bf16.mxu0 0
    %1630 = vmatpush1.bf16.msra.mxu0 0
    %1631 = vmatprep.subr.bf16.mxu0 0
    %1632 = vmatpush1.bf16.msra.mxu0 0
    %1633 = vmatprep.subr.bf16.mxu0 0
    %1634 = vmatpush1.bf16.msra.mxu0 0
    %1635 = vmatprep.subr.bf16.mxu0 0
    %1636 = vmatpush1.bf16.msra.mxu0 0
    %1637 = vmatprep.subr.bf16.mxu0 0
    %1638 = vmatpush1.bf16.msra.mxu0 0
    %1639 = vmatprep.subr.bf16.mxu0 0
    %1640 = vmatpush1.bf16.msra.mxu0 0
    %1641 = vmatprep.subr.bf16.mxu0 0
    %1642 = vmatpush1.bf16.msra.mxu0 0
    %1643 = vmatprep.subr.bf16.mxu0 0
    %1644 = vmatpush1.bf16.msra.mxu0 0
    %1645 = vmatprep.subr.bf16.mxu0 0
    %1646 = vmatpush1.bf16.msra.mxu0 0
    %1647 = vmatprep.subr.bf16.mxu0 0
    %1648 = vmatpush1.bf16.msra.mxu0 0
    %1649 = vmatprep.subr.bf16.mxu0 0
    %1650 = vmatpush1.bf16.msra.mxu0 0
    %1651 = vmatprep.subr.bf16.mxu0 0
    %1652 = vmatpush1.bf16.msra.mxu0 0
    %1653 = vmatprep.subr.bf16.mxu0 0
    %1654 = vmatpush1.bf16.msra.mxu0 0
    %1655 = vmatprep.mubr.bf16.mxu0 0
    %1656 = vmatmul.mubr.bf16.gmra.mrb[0].mxu0 %v1019
    %v1657 = vpop.f32.mrb[0].mxu0
    %v1658 = vadd.f32 %v1515, %v1657
    %v1659 = vpop.f32.mrb[0].mxu0
    %v1660 = vadd.f32 %v1517, %v1659
    %v1661 = vpop.f32.mrb[0].mxu0
    %v1662 = vadd.f32 %v1519, %v1661
    %v1663 = vpop.f32.mrb[0].mxu0
    %v1664 = vadd.f32 %v1521, %v1663
    %1665 = vmatprep.mubr.bf16.mxu0 0
    %1666 = vmatmul.mubr.bf16.gmra.mrb[0].mxu0 %v1022
    %v1667 = vpop.f32.mrb[0].mxu0
    %v1668 = vadd.f32 %v1525, %v1667
    %v1669 = vpop.f32.mrb[0].mxu0
    %v1670 = vadd.f32 %v1527, %v1669
    %v1671 = vpop.f32.mrb[0].mxu0
    %v1672 = vadd.f32 %v1529, %v1671
    %v1673 = vpop.f32.mrb[0].mxu0
    %v1674 = vadd.f32 %v1531, %v1673
    %1675 = vmatprep.mubr.bf16.mxu0 0
    %1676 = vmatmul.mubr.bf16.gmra.mrb[0].mxu0 %v1025
    %v1677 = vpop.f32.mrb[0].mxu0
    %v1678 = vadd.f32 %v1535, %v1677
    %v1679 = vpop.f32.mrb[0].mxu0
    %v1680 = vadd.f32 %v1537, %v1679
    %v1681 = vpop.f32.mrb[0].mxu0
    %v1682 = vadd.f32 %v1539, %v1681
    %v1683 = vpop.f32.mrb[0].mxu0
    %v1684 = vadd.f32 %v1541, %v1683
    %1685 = vmatprep.mubr.bf16.mxu0 0
    %1686 = vmatmul.mubr.bf16.gmra.mrb[0].mxu0 %v1028
    %v1687 = vpop.f32.mrb[0].mxu0
    %v1688 = vadd.f32 %v1545, %v1687
    %v1689 = vpop.f32.mrb[0].mxu0
    %v1690 = vadd.f32 %v1547, %v1689
    %v1691 = vpop.f32.mrb[0].mxu0
    %v1692 = vadd.f32 %v1549, %v1691
    %v1693 = vpop.f32.mrb[0].mxu0
    %v1694 = vadd.f32 %v1551, %v1693
    %1695 = vmatprep.mubr.bf16.mxu0 0
    %1696 = vmatmul.mubr.bf16.gmra.mrb[0].mxu0 %v1031
    %v1697 = vpop.f32.mrb[0].mxu0
    %v1698 = vadd.f32 %v1555, %v1697
    %v1699 = vpop.f32.mrb[0].mxu0
    %v1700 = vadd.f32 %v1557, %v1699
    %v1701 = vpop.f32.mrb[0].mxu0
    %v1702 = vadd.f32 %v1559, %v1701
    %v1703 = vpop.f32.mrb[0].mxu0
    %v1704 = vadd.f32 %v1561, %v1703
    %1705 = vmatprep.mubr.bf16.mxu0 0
    %1706 = vmatmul.mubr.bf16.gmra.mrb[0].mxu0 %v1034
    %v1707 = vpop.f32.mrb[0].mxu0
    %v1708 = vadd.f32 %v1565, %v1707
    %v1709 = vpop.f32.mrb[0].mxu0
    %v1710 = vadd.f32 %v1567, %v1709
    %v1711 = vpop.f32.mrb[0].mxu0
    %v1712 = vadd.f32 %v1569, %v1711
    %v1713 = vpop.f32.mrb[0].mxu0
    %v1714 = vadd.f32 %v1571, %v1713
    %1715 = vmatprep.mubr.bf16.mxu0 0
    %1716 = vmatmul.mubr.bf16.gmra.mrb[0].mxu0 %v1037
    %v1717 = vpop.f32.mrb[0].mxu0
    %v1718 = vadd.f32 %v1575, %v1717
    %v1719 = vpop.f32.mrb[0].mxu0
    %v1720 = vadd.f32 %v1577, %v1719
    %v1721 = vpop.f32.mrb[0].mxu0
    %v1722 = vadd.f32 %v1579, %v1721
    %v1723 = vpop.f32.mrb[0].mxu0
    %v1724 = vadd.f32 %v1581, %v1723
    %1725 = vmatprep.mubr.bf16.mxu0 0
    %1726 = vmatmul.mubr.bf16.gmra.mrb[0].mxu0 %v1040
    %v1727 = vpop.f32.mrb[0].mxu0
    %v1728 = vadd.f32 %v1585, %v1727
    %v1729 = vpop.f32.mrb[0].mxu0
    %v1730 = vadd.f32 %v1587, %v1729
    %v1731 = vpop.f32.mrb[0].mxu0
    %v1732 = vadd.f32 %v1589, %v1731
    %v1733 = vpop.f32.mrb[0].mxu0
    %v1734 = vadd.f32 %v1591, %v1733
    %1735 = vmatprep.mubr.bf16.mxu0 0
    %1736 = vmatmul.mubr.bf16.gmra.mrb[0].mxu0 %v1043
    %v1737 = vpop.f32.mrb[0].mxu0
    %v1738 = vadd.f32 %v1595, %v1737
    %v1739 = vpop.f32.mrb[0].mxu0
    %v1740 = vadd.f32 %v1597, %v1739
    %v1741 = vpop.f32.mrb[0].mxu0
    %v1742 = vadd.f32 %v1599, %v1741
    %v1743 = vpop.f32.mrb[0].mxu0
    %v1744 = vadd.f32 %v1601, %v1743
    %1745 = vmatprep.mubr.bf16.mxu0 0
    %1746 = vmatmul.mubr.bf16.gmra.mrb[0].mxu0 %v1046
    %v1747 = vpop.f32.mrb[0].mxu0
    %v1748 = vadd.f32 %v1605, %v1747
    %v1749 = vpop.f32.mrb[0].mxu0
    %v1750 = vadd.f32 %v1607, %v1749
    %v1751 = vpop.f32.mrb[0].mxu0
    %v1752 = vadd.f32 %v1609, %v1751
    %v1753 = vpop.f32.mrb[0].mxu0
    %v1754 = vadd.f32 %v1611, %v1753
    %1755 = vmatprep.mubr.bf16.mxu0 0
    %1756 = vmatmul.mubr.bf16.gmra.mrb[0].mxu0 %v1049
    %v1757 = vpop.f32.mrb[0].mxu0
    %v1758 = vadd.f32 %v1615, %v1757
    %v1759 = vpop.f32.mrb[0].mxu0
    %v1760 = vadd.f32 %v1617, %v1759
    %v1761 = vpop.f32.mrb[0].mxu0
    %v1762 = vadd.f32 %v1619, %v1761
    %v1763 = vpop.f32.mrb[0].mxu0
    %v1764 = vadd.f32 %v1621, %v1763
    %1765 = vdwg.mxu0
    %vm1766 = vcmask 556032
    %v1767 = vsel %vm1766, %v1660, 0.0
    %v1768 = vadd.f32 %v1658, %v1767
    %1769 = vadd.xlane.f32.xlu0 %v1768
    %v1770 = vpop.xlane.xlu0 %1769
    %v1771 = vsel %vm1766, %v1664, 0.0
    %v1772 = vadd.f32 %v1662, %v1771
    %1773 = vadd.xlane.f32.xlu0 %v1772
    %v1774 = vpop.xlane.xlu0 %1773
    %v1775 = vsel %vm1766, %v1670, 0.0
    %v1776 = vadd.f32 %v1668, %v1775
    %1777 = vadd.xlane.f32.xlu0 %v1776
    %v1778 = vpop.xlane.xlu0 %1777
    %v1779 = vsel %vm1766, %v1674, 0.0
    %v1780 = vadd.f32 %v1672, %v1779
    %1781 = vadd.xlane.f32.xlu0 %v1780
    %v1782 = vpop.xlane.xlu0 %1781
    %v1783 = vsel %vm1766, %v1680, 0.0
    %v1784 = vadd.f32 %v1678, %v1783
    %1785 = vadd.xlane.f32.xlu0 %v1784
    %v1786 = vpop.xlane.xlu0 %1785
    %v1787 = vsel %vm1766, %v1684, 0.0
    %v1788 = vadd.f32 %v1682, %v1787
    %1789 = vadd.xlane.f32.xlu0 %v1788
    %v1790 = vpop.xlane.xlu0 %1789
    %v1791 = vsel %vm1766, %v1690, 0.0
    %v1792 = vadd.f32 %v1688, %v1791
    %1793 = vadd.xlane.f32.xlu0 %v1792
    %v1794 = vpop.xlane.xlu0 %1793
    %v1795 = vsel %vm1766, %v1694, 0.0
    %v1796 = vadd.f32 %v1692, %v1795
    %1797 = vadd.xlane.f32.xlu0 %v1796
    %v1798 = vpop.xlane.xlu0 %1797
    %v1799 = vsel %vm1766, %v1700, 0.0
    %v1800 = vadd.f32 %v1698, %v1799
    %1801 = vadd.xlane.f32.xlu0 %v1800
    %v1802 = vpop.xlane.xlu0 %1801
    %v1803 = vsel %vm1766, %v1704, 0.0
    %v1804 = vadd.f32 %v1702, %v1803
    %1805 = vadd.xlane.f32.xlu0 %v1804
    %v1806 = vpop.xlane.xlu0 %1805
    %v1807 = vsel %vm1766, %v1710, 0.0
    %v1808 = vadd.f32 %v1708, %v1807
    %1809 = vadd.xlane.f32.xlu0 %v1808
    %v1810 = vpop.xlane.xlu0 %1809
    %v1811 = vsel %vm1766, %v1714, 0.0
    %v1812 = vadd.f32 %v1712, %v1811
    %1813 = vadd.xlane.f32.xlu0 %v1812
    %v1814 = vpop.xlane.xlu0 %1813
    %v1815 = vsel %vm1766, %v1720, 0.0
    %v1816 = vadd.f32 %v1718, %v1815
    %1817 = vadd.xlane.f32.xlu0 %v1816
    %v1818 = vpop.xlane.xlu0 %1817
    %v1819 = vsel %vm1766, %v1724, 0.0
    %v1820 = vadd.f32 %v1722, %v1819
    %1821 = vadd.xlane.f32.xlu0 %v1820
    %v1822 = vpop.xlane.xlu0 %1821
    %v1823 = vsel %vm1766, %v1730, 0.0
    %v1824 = vadd.f32 %v1728, %v1823
    %1825 = vadd.xlane.f32.xlu0 %v1824
    %v1826 = vpop.xlane.xlu0 %1825
    %v1827 = vsel %vm1766, %v1734, 0.0
    %v1828 = vadd.f32 %v1732, %v1827
    %1829 = vadd.xlane.f32.xlu0 %v1828
    %v1830 = vpop.xlane.xlu0 %1829
    %v1831 = vsel %vm1766, %v1740, 0.0
    %v1832 = vadd.f32 %v1738, %v1831
    %1833 = vadd.xlane.f32.xlu0 %v1832
    %v1834 = vpop.xlane.xlu0 %1833
    %v1835 = vsel %vm1766, %v1744, 0.0
    %v1836 = vadd.f32 %v1742, %v1835
    %1837 = vadd.xlane.f32.xlu0 %v1836
    %v1838 = vpop.xlane.xlu0 %1837
    %v1839 = vsel %vm1766, %v1750, 0.0
    %v1840 = vadd.f32 %v1748, %v1839
    %1841 = vadd.xlane.f32.xlu0 %v1840
    %v1842 = vpop.xlane.xlu0 %1841
    %v1843 = vsel %vm1766, %v1754, 0.0
    %v1844 = vadd.f32 %v1752, %v1843
    %1845 = vadd.xlane.f32.xlu0 %v1844
    %v1846 = vpop.xlane.xlu0 %1845
    %v1847 = vsel %vm1766, %v1760, 0.0
    %v1848 = vadd.f32 %v1758, %v1847
    %1849 = vadd.xlane.f32.xlu0 %v1848
    %v1850 = vpop.xlane.xlu0 %1849
    %v1851 = vsel %vm1766, %v1764, 0.0
    %v1852 = vadd.f32 %v1762, %v1851
    %1853 = vadd.xlane.f32.xlu0 %v1852
    %v1854 = vpop.xlane.xlu0 %1853
    %v1855 = vmul.f32 %v1770, 0.0051020407
    %v1856 = vmul.f32 %v1774, 0.0051020407
    %v1857 = vmul.f32 %v1778, 0.0051020407
    %v1858 = vmul.f32 %v1782, 0.0051020407
    %v1859 = vmul.f32 %v1786, 0.0051020407
    %v1860 = vmul.f32 %v1790, 0.0051020407
    %v1861 = vmul.f32 %v1794, 0.0051020407
    %v1862 = vmul.f32 %v1798, 0.0051020407
    %v1863 = vmul.f32 %v1802, 0.0051020407
    %v1864 = vmul.f32 %v1806, 0.0051020407
    %v1865 = vmul.f32 %v1810, 0.0051020407
    %v1866 = vmul.f32 %v1814, 0.0051020407
    %v1867 = vmul.f32 %v1818, 0.0051020407
    %v1868 = vmul.f32 %v1822, 0.0051020407
    %v1869 = vmul.f32 %v1826, 0.0051020407
    %v1870 = vmul.f32 %v1830, 0.0051020407
    %v1871 = vmul.f32 %v1834, 0.0051020407
    %v1872 = vmul.f32 %v1838, 0.0051020407
    %v1873 = vmul.f32 %v1842, 0.0051020407
    %v1874 = vmul.f32 %v1846, 0.0051020407
    %v1875 = vmul.f32 %v1850, 0.0051020407
    %v1876 = vmul.f32 %v1854, 0.0051020407
    %v1877 = vsub.f32 %v1658, %v1855
    %v1878 = vsub.f32 %v1660, %v1855
    %v1879 = vsub.f32 %v1662, %v1856
    %v1880 = vsub.f32 %v1664, %v1856
    %v1881 = vsub.f32 %v1668, %v1857
    %v1882 = vsub.f32 %v1670, %v1857
    %v1883 = vsub.f32 %v1672, %v1858
    %v1884 = vsub.f32 %v1674, %v1858
    %v1885 = vsub.f32 %v1678, %v1859
    %v1886 = vsub.f32 %v1680, %v1859
    %v1887 = vsub.f32 %v1682, %v1860
    %v1888 = vsub.f32 %v1684, %v1860
    %v1889 = vsub.f32 %v1688, %v1861
    %v1890 = vsub.f32 %v1690, %v1861
    %v1891 = vsub.f32 %v1692, %v1862
    %v1892 = vsub.f32 %v1694, %v1862
    %v1893 = vsub.f32 %v1698, %v1863
    %v1894 = vsub.f32 %v1700, %v1863
    %v1895 = vsub.f32 %v1702, %v1864
    %v1896 = vsub.f32 %v1704, %v1864
    %v1897 = vsub.f32 %v1708, %v1865
    %v1898 = vsub.f32 %v1710, %v1865
    %v1899 = vsub.f32 %v1712, %v1866
    %v1900 = vsub.f32 %v1714, %v1866
    %v1901 = vsub.f32 %v1718, %v1867
    %v1902 = vsub.f32 %v1720, %v1867
    %v1903 = vsub.f32 %v1722, %v1868
    %v1904 = vsub.f32 %v1724, %v1868
    %v1905 = vsub.f32 %v1728, %v1869
    %v1906 = vsub.f32 %v1730, %v1869
    %v1907 = vsub.f32 %v1732, %v1870
    %v1908 = vsub.f32 %v1734, %v1870
    %v1909 = vsub.f32 %v1738, %v1871
    %v1910 = vsub.f32 %v1740, %v1871
    %v1911 = vsub.f32 %v1742, %v1872
    %v1912 = vsub.f32 %v1744, %v1872
    %v1913 = vsub.f32 %v1748, %v1873
    %v1914 = vsub.f32 %v1750, %v1873
    %v1915 = vsub.f32 %v1752, %v1874
    %v1916 = vsub.f32 %v1754, %v1874
    %v1917 = vsub.f32 %v1758, %v1875
    %v1918 = vsub.f32 %v1760, %v1875
    %v1919 = vsub.f32 %v1762, %v1876
    %v1920 = vsub.f32 %v1764, %v1876
    %v1921 = vmul.f32 %v1877, %v1877
    %v1922 = vmul.f32 %v1878, %v1878
    %v1923 = vmul.f32 %v1879, %v1879
    %v1924 = vmul.f32 %v1880, %v1880
    %v1925 = vmul.f32 %v1881, %v1881
    %v1926 = vmul.f32 %v1882, %v1882
    %v1927 = vmul.f32 %v1883, %v1883
    %v1928 = vmul.f32 %v1884, %v1884
    %v1929 = vmul.f32 %v1885, %v1885
    %v1930 = vmul.f32 %v1886, %v1886
    %v1931 = vmul.f32 %v1887, %v1887
    %v1932 = vmul.f32 %v1888, %v1888
    %v1933 = vmul.f32 %v1889, %v1889
    %v1934 = vmul.f32 %v1890, %v1890
    %v1935 = vmul.f32 %v1891, %v1891
    %v1936 = vmul.f32 %v1892, %v1892
    %v1937 = vmul.f32 %v1893, %v1893
    %v1938 = vmul.f32 %v1894, %v1894
    %v1939 = vmul.f32 %v1895, %v1895
    %v1940 = vmul.f32 %v1896, %v1896
    %v1941 = vmul.f32 %v1897, %v1897
    %v1942 = vmul.f32 %v1898, %v1898
    %v1943 = vmul.f32 %v1899, %v1899
    %v1944 = vmul.f32 %v1900, %v1900
    %v1945 = vmul.f32 %v1901, %v1901
    %v1946 = vmul.f32 %v1902, %v1902
    %v1947 = vmul.f32 %v1903, %v1903
    %v1948 = vmul.f32 %v1904, %v1904
    %v1949 = vmul.f32 %v1905, %v1905
    %v1950 = vmul.f32 %v1906, %v1906
    %v1951 = vmul.f32 %v1907, %v1907
    %v1952 = vmul.f32 %v1908, %v1908
    %v1953 = vmul.f32 %v1909, %v1909
    %v1954 = vmul.f32 %v1910, %v1910
    %v1955 = vmul.f32 %v1911, %v1911
    %v1956 = vmul.f32 %v1912, %v1912
    %v1957 = vmul.f32 %v1913, %v1913
    %v1958 = vmul.f32 %v1914, %v1914
    %v1959 = vmul.f32 %v1915, %v1915
    %v1960 = vmul.f32 %v1916, %v1916
    %v1961 = vmul.f32 %v1917, %v1917
    %v1962 = vmul.f32 %v1918, %v1918
    %v1963 = vmul.f32 %v1919, %v1919
    %v1964 = vmul.f32 %v1920, %v1920
    %v1965 = vsel %vm1766, %v1922, 0.0
    %v1966 = vadd.f32 %v1921, %v1965
    %1967 = vadd.xlane.f32.xlu0 %v1966
    %v1968 = vpop.xlane.xlu0 %1967
    %v1969 = vsel %vm1766, %v1924, 0.0
    %v1970 = vadd.f32 %v1923, %v1969
    %1971 = vadd.xlane.f32.xlu0 %v1970
    %v1972 = vpop.xlane.xlu0 %1971
    %v1973 = vsel %vm1766, %v1926, 0.0
    %v1974 = vadd.f32 %v1925, %v1973
    %1975 = vadd.xlane.f32.xlu0 %v1974
    %v1976 = vpop.xlane.xlu0 %1975
    %v1977 = vsel %vm1766, %v1928, 0.0
    %v1978 = vadd.f32 %v1927, %v1977
    %1979 = vadd.xlane.f32.xlu0 %v1978
    %v1980 = vpop.xlane.xlu0 %1979
    %v1981 = vsel %vm1766, %v1930, 0.0
    %v1982 = vadd.f32 %v1929, %v1981
    %1983 = vadd.xlane.f32.xlu0 %v1982
    %v1984 = vpop.xlane.xlu0 %1983
    %v1985 = vsel %vm1766, %v1932, 0.0
    %v1986 = vadd.f32 %v1931, %v1985
    %1987 = vadd.xlane.f32.xlu0 %v1986
    %v1988 = vpop.xlane.xlu0 %1987
    %v1989 = vsel %vm1766, %v1934, 0.0
    %v1990 = vadd.f32 %v1933, %v1989
    %1991 = vadd.xlane.f32.xlu0 %v1990
    %v1992 = vpop.xlane.xlu0 %1991
    %v1993 = vsel %vm1766, %v1936, 0.0
    %v1994 = vadd.f32 %v1935, %v1993
    %1995 = vadd.xlane.f32.xlu0 %v1994
    %v1996 = vpop.xlane.xlu0 %1995
    %v1997 = vsel %vm1766, %v1938, 0.0
    %v1998 = vadd.f32 %v1937, %v1997
    %1999 = vadd.xlane.f32.xlu0 %v1998
    %v2000 = vpop.xlane.xlu0 %1999
    %v2001 = vsel %vm1766, %v1940, 0.0
    %v2002 = vadd.f32 %v1939, %v2001
    %2003 = vadd.xlane.f32.xlu0 %v2002
    %v2004 = vpop.xlane.xlu0 %2003
    %v2005 = vsel %vm1766, %v1942, 0.0
    %v2006 = vadd.f32 %v1941, %v2005
    %2007 = vadd.xlane.f32.xlu0 %v2006
    %v2008 = vpop.xlane.xlu0 %2007
    %v2009 = vsel %vm1766, %v1944, 0.0
    %v2010 = vadd.f32 %v1943, %v2009
    %2011 = vadd.xlane.f32.xlu0 %v2010
    %v2012 = vpop.xlane.xlu0 %2011
    %v2013 = vsel %vm1766, %v1946, 0.0
    %v2014 = vadd.f32 %v1945, %v2013
    %2015 = vadd.xlane.f32.xlu0 %v2014
    %v2016 = vpop.xlane.xlu0 %2015
    %v2017 = vsel %vm1766, %v1948, 0.0
    %v2018 = vadd.f32 %v1947, %v2017
    %2019 = vadd.xlane.f32.xlu0 %v2018
    %v2020 = vpop.xlane.xlu0 %2019
    %v2021 = vsel %vm1766, %v1950, 0.0
    %v2022 = vadd.f32 %v1949, %v2021
    %2023 = vadd.xlane.f32.xlu0 %v2022
    %v2024 = vpop.xlane.xlu0 %2023
    %v2025 = vsel %vm1766, %v1952, 0.0
    %v2026 = vadd.f32 %v1951, %v2025
    %2027 = vadd.xlane.f32.xlu0 %v2026
    %v2028 = vpop.xlane.xlu0 %2027
    %v2029 = vsel %vm1766, %v1954, 0.0
    %v2030 = vadd.f32 %v1953, %v2029
    %2031 = vadd.xlane.f32.xlu0 %v2030
    %v2032 = vpop.xlane.xlu0 %2031
    %v2033 = vsel %vm1766, %v1956, 0.0
    %v2034 = vadd.f32 %v1955, %v2033
    %2035 = vadd.xlane.f32.xlu0 %v2034
    %v2036 = vpop.xlane.xlu0 %2035
    %v2037 = vsel %vm1766, %v1958, 0.0
    %v2038 = vadd.f32 %v1957, %v2037
    %2039 = vadd.xlane.f32.xlu0 %v2038
    %v2040 = vpop.xlane.xlu0 %2039
    %v2041 = vsel %vm1766, %v1960, 0.0
    %v2042 = vadd.f32 %v1959, %v2041
    %2043 = vadd.xlane.f32.xlu0 %v2042
    %v2044 = vpop.xlane.xlu0 %2043
    %v2045 = vsel %vm1766, %v1962, 0.0
    %v2046 = vadd.f32 %v1961, %v2045
    %2047 = vadd.xlane.f32.xlu0 %v2046
    %v2048 = vpop.xlane.xlu0 %2047
    %v2049 = vsel %vm1766, %v1964, 0.0
    %v2050 = vadd.f32 %v1963, %v2049
    %2051 = vadd.xlane.f32.xlu0 %v2050
    %v2052 = vpop.xlane.xlu0 %2051
    %v2053 = vmul.f32 %v1968, 0.0051020407
    %v2054 = vmul.f32 %v1972, 0.0051020407
    %v2055 = vmul.f32 %v1976, 0.0051020407
    %v2056 = vmul.f32 %v1980, 0.0051020407
    %v2057 = vmul.f32 %v1984, 0.0051020407
    %v2058 = vmul.f32 %v1988, 0.0051020407
    %v2059 = vmul.f32 %v1992, 0.0051020407
    %v2060 = vmul.f32 %v1996, 0.0051020407
    %v2061 = vmul.f32 %v2000, 0.0051020407
    %v2062 = vmul.f32 %v2004, 0.0051020407
    %v2063 = vmul.f32 %v2008, 0.0051020407
    %v2064 = vmul.f32 %v2012, 0.0051020407
    %v2065 = vmul.f32 %v2016, 0.0051020407
    %v2066 = vmul.f32 %v2020, 0.0051020407
    %v2067 = vmul.f32 %v2024, 0.0051020407
    %v2068 = vmul.f32 %v2028, 0.0051020407
    %v2069 = vmul.f32 %v2032, 0.0051020407
    %v2070 = vmul.f32 %v2036, 0.0051020407
    %v2071 = vmul.f32 %v2040, 0.0051020407
    %v2072 = vmul.f32 %v2044, 0.0051020407
    %v2073 = vmul.f32 %v2048, 0.0051020407
    %v2074 = vmul.f32 %v2052, 0.0051020407
    %v2075 = vadd.f32 %v2053, 0.001
    %v2076 = vadd.f32 %v2054, 0.001
    %v2077 = vadd.f32 %v2055, 0.001
    %v2078 = vadd.f32 %v2056, 0.001
    %v2079 = vadd.f32 %v2057, 0.001
    %v2080 = vadd.f32 %v2058, 0.001
    %v2081 = vadd.f32 %v2059, 0.001
    %v2082 = vadd.f32 %v2060, 0.001
    %v2083 = vadd.f32 %v2061, 0.001
    %v2084 = vadd.f32 %v2062, 0.001
    %v2085 = vadd.f32 %v2063, 0.001
    %v2086 = vadd.f32 %v2064, 0.001
    %v2087 = vadd.f32 %v2065, 0.001
    %v2088 = vadd.f32 %v2066, 0.001
    %v2089 = vadd.f32 %v2067, 0.001
    %v2090 = vadd.f32 %v2068, 0.001
    %v2091 = vadd.f32 %v2069, 0.001
    %v2092 = vadd.f32 %v2070, 0.001
    %v2093 = vadd.f32 %v2071, 0.001
    %v2094 = vadd.f32 %v2072, 0.001
    %v2095 = vadd.f32 %v2073, 0.001
    %v2096 = vadd.f32 %v2074, 0.001
    %v2097 = vrsqrt.pop %v2075
    %v2098 = vrsqrt.pop %v2076
    %v2099 = vrsqrt.pop %v2077
    %v2100 = vrsqrt.pop %v2078
    %v2101 = vrsqrt.pop %v2079
    %v2102 = vrsqrt.pop %v2080
    %v2103 = vrsqrt.pop %v2081
    %v2104 = vrsqrt.pop %v2082
    %v2105 = vrsqrt.pop %v2083
    %v2106 = vrsqrt.pop %v2084
    %v2107 = vrsqrt.pop %v2085
    %v2108 = vrsqrt.pop %v2086
    %v2109 = vrsqrt.pop %v2087
    %v2110 = vrsqrt.pop %v2088
    %v2111 = vrsqrt.pop %v2089
    %v2112 = vrsqrt.pop %v2090
    %v2113 = vrsqrt.pop %v2091
    %v2114 = vrsqrt.pop %v2092
    %v2115 = vrsqrt.pop %v2093
    %v2116 = vrsqrt.pop %v2094
    %v2117 = vrsqrt.pop %v2095
    %v2118 = vrsqrt.pop %v2096
    %v2119 = vld [vmem:[%s2] sm:$0xff]
    %v2120 = vld [vmem:[%s2 + $0x8] sm:$0xff]
    %v2121 = vld [vmem:[%s2 + $0x10] sm:$0xff]
    %v2122 = vld [vmem:[%s2 + $0x18] sm:$0xff]
    %v2123 = vld [vmem:[%s2 + $0x20] sm:$0xff]
    %v2124 = vld [vmem:[%s2 + $0x28] sm:$0xff]
    %v2125 = vld [vmem:[%s2 + $0x30] sm:$0xff]
    %v2126 = vld [vmem:[%s2 + $0x38] sm:$0xff]
    %v2127 = vld [vmem:[%s2 + $0x40] sm:$0xff]
    %v2128 = vld [vmem:[%s2 + $0x48] sm:$0xff]
    %v2129 = vld [vmem:[%s2 + $0x50] sm:$0xff]
    %v2130 = vld [vmem:[%s2 + $0x58] sm:$0xff]
    %v2131 = vld [vmem:[%s2 + $0x60] sm:$0xff]
    %v2132 = vld [vmem:[%s2 + $0x68] sm:$0xff]
    %v2133 = vld [vmem:[%s2 + $0x70] sm:$0xff]
    %v2134 = vld [vmem:[%s2 + $0x78] sm:$0xff]
    %v2135 = vld [vmem:[%s2 + $0x80] sm:$0xff]
    %v2136 = vld [vmem:[%s2 + $0x88] sm:$0xff]
    %v2137 = vld [vmem:[%s2 + $0x90] sm:$0xff]
    %v2138 = vld [vmem:[%s2 + $0x98] sm:$0xff]
    %v2139 = vld [vmem:[%s2 + $0xa0] sm:$0xff]
    %v2140 = vld [vmem:[%s2 + $0xa8] sm:$0xff]
    %v2141 = vmul.f32 %v2119, %v2097
    %v2142 = vmul.f32 %v2120, %v2098
    %v2143 = vmul.f32 %v2121, %v2099
    %v2144 = vmul.f32 %v2122, %v2100
    %v2145 = vmul.f32 %v2123, %v2101
    %v2146 = vmul.f32 %v2124, %v2102
    %v2147 = vmul.f32 %v2125, %v2103
    %v2148 = vmul.f32 %v2126, %v2104
    %v2149 = vmul.f32 %v2127, %v2105
    %v2150 = vmul.f32 %v2128, %v2106
    %v2151 = vmul.f32 %v2129, %v2107
    %v2152 = vmul.f32 %v2130, %v2108
    %v2153 = vmul.f32 %v2131, %v2109
    %v2154 = vmul.f32 %v2132, %v2110
    %v2155 = vmul.f32 %v2133, %v2111
    %v2156 = vmul.f32 %v2134, %v2112
    %v2157 = vmul.f32 %v2135, %v2113
    %v2158 = vmul.f32 %v2136, %v2114
    %v2159 = vmul.f32 %v2137, %v2115
    %v2160 = vmul.f32 %v2138, %v2116
    %v2161 = vmul.f32 %v2139, %v2117
    %v2162 = vmul.f32 %v2140, %v2118
    %2164 = vset.pattern.permute.xlu0 0
    %2165 = vperm.xlu0 %2164, %v2141
    %v2166 = vpop.permute.xlu0 %2165
    %2169 = vset.pattern.permute.xlu0 0
    %2170 = vperm.xlu0 %2169, %v2142
    %v2171 = vpop.permute.xlu0 %2170
    %2174 = vset.pattern.permute.xlu0 0
    %2175 = vperm.xlu0 %2174, %v2143
    %v2176 = vpop.permute.xlu0 %2175
    %2179 = vset.pattern.permute.xlu0 0
    %2180 = vperm.xlu0 %2179, %v2144
    %v2181 = vpop.permute.xlu0 %2180
    %2184 = vset.pattern.permute.xlu0 0
    %2185 = vperm.xlu0 %2184, %v2145
    %v2186 = vpop.permute.xlu0 %2185
    %2189 = vset.pattern.permute.xlu0 0
    %2190 = vperm.xlu0 %2189, %v2146
    %v2191 = vpop.permute.xlu0 %2190
    %2194 = vset.pattern.permute.xlu0 0
    %2195 = vperm.xlu0 %2194, %v2147
    %v2196 = vpop.permute.xlu0 %2195
    %2199 = vset.pattern.permute.xlu0 0
    %2200 = vperm.xlu0 %2199, %v2148
    %v2201 = vpop.permute.xlu0 %2200
    %2204 = vset.pattern.permute.xlu0 0
    %2205 = vperm.xlu0 %2204, %v2149
    %v2206 = vpop.permute.xlu0 %2205
    %2209 = vset.pattern.permute.xlu0 0
    %2210 = vperm.xlu0 %2209, %v2150
    %v2211 = vpop.permute.xlu0 %2210
    %2214 = vset.pattern.permute.xlu0 0
    %2215 = vperm.xlu0 %2214, %v2151
    %v2216 = vpop.permute.xlu0 %2215
    %2219 = vset.pattern.permute.xlu0 0
    %2220 = vperm.xlu0 %2219, %v2152
    %v2221 = vpop.permute.xlu0 %2220
    %2224 = vset.pattern.permute.xlu0 0
    %2225 = vperm.xlu0 %2224, %v2153
    %v2226 = vpop.permute.xlu0 %2225
    %2229 = vset.pattern.permute.xlu0 0
    %2230 = vperm.xlu0 %2229, %v2154
    %v2231 = vpop.permute.xlu0 %2230
    %2234 = vset.pattern.permute.xlu0 0
    %2235 = vperm.xlu0 %2234, %v2155
    %v2236 = vpop.permute.xlu0 %2235
    %2239 = vset.pattern.permute.xlu0 0
    %2240 = vperm.xlu0 %2239, %v2156
    %v2241 = vpop.permute.xlu0 %2240
    %2244 = vset.pattern.permute.xlu0 0
    %2245 = vperm.xlu0 %2244, %v2157
    %v2246 = vpop.permute.xlu0 %2245
    %2249 = vset.pattern.permute.xlu0 0
    %2250 = vperm.xlu0 %2249, %v2158
    %v2251 = vpop.permute.xlu0 %2250
    %2254 = vset.pattern.permute.xlu0 0
    %2255 = vperm.xlu0 %2254, %v2159
    %v2256 = vpop.permute.xlu0 %2255
    %2259 = vset.pattern.permute.xlu0 0
    %2260 = vperm.xlu0 %2259, %v2160
    %v2261 = vpop.permute.xlu0 %2260
    %2264 = vset.pattern.permute.xlu0 0
    %2265 = vperm.xlu0 %2264, %v2161
    %v2266 = vpop.permute.xlu0 %2265
    %2269 = vset.pattern.permute.xlu0 0
    %2270 = vperm.xlu0 %2269, %v2162
    %v2271 = vpop.permute.xlu0 %2270
    %v2273 = vmul.f32 %v1877, %v2166
    %v2274 = vmul.f32 %v1878, %v2166
    %v2275 = vmul.f32 %v1879, %v2171
    %v2276 = vmul.f32 %v1880, %v2171
    %v2277 = vmul.f32 %v1881, %v2176
    %v2278 = vmul.f32 %v1882, %v2176
    %v2279 = vmul.f32 %v1883, %v2181
    %v2280 = vmul.f32 %v1884, %v2181
    %v2281 = vmul.f32 %v1885, %v2186
    %v2282 = vmul.f32 %v1886, %v2186
    %v2283 = vmul.f32 %v1887, %v2191
    %v2284 = vmul.f32 %v1888, %v2191
    %v2285 = vmul.f32 %v1889, %v2196
    %v2286 = vmul.f32 %v1890, %v2196
    %v2287 = vmul.f32 %v1891, %v2201
    %v2288 = vmul.f32 %v1892, %v2201
    %v2289 = vmul.f32 %v1893, %v2206
    %v2290 = vmul.f32 %v1894, %v2206
    %v2291 = vmul.f32 %v1895, %v2211
    %v2292 = vmul.f32 %v1896, %v2211
    %v2293 = vmul.f32 %v1897, %v2216
    %v2294 = vmul.f32 %v1898, %v2216
    %v2295 = vmul.f32 %v1899, %v2221
    %v2296 = vmul.f32 %v1900, %v2221
    %v2297 = vmul.f32 %v1901, %v2226
    %v2298 = vmul.f32 %v1902, %v2226
    %v2299 = vmul.f32 %v1903, %v2231
    %v2300 = vmul.f32 %v1904, %v2231
    %v2301 = vmul.f32 %v1905, %v2236
    %v2302 = vmul.f32 %v1906, %v2236
    %v2303 = vmul.f32 %v1907, %v2241
    %v2304 = vmul.f32 %v1908, %v2241
    %v2305 = vmul.f32 %v1909, %v2246
    %v2306 = vmul.f32 %v1910, %v2246
    %v2307 = vmul.f32 %v1911, %v2251
    %v2308 = vmul.f32 %v1912, %v2251
    %v2309 = vmul.f32 %v1913, %v2256
    %v2310 = vmul.f32 %v1914, %v2256
    %v2311 = vmul.f32 %v1915, %v2261
    %v2312 = vmul.f32 %v1916, %v2261
    %v2313 = vmul.f32 %v1917, %v2266
    %v2314 = vmul.f32 %v1918, %v2266
    %v2315 = vmul.f32 %v1919, %v2271
    %v2316 = vmul.f32 %v1920, %v2271
    %2318 = vset.pattern.permute.xlu0 1
    %2319 = vperm.xlu0 %2318, %v2119
    %v2320 = vpop.permute.xlu0 %2319
    %2323 = vset.pattern.permute.xlu0 1
    %2324 = vperm.xlu0 %2323, %v2120
    %v2325 = vpop.permute.xlu0 %2324
    %2328 = vset.pattern.permute.xlu0 1
    %2329 = vperm.xlu0 %2328, %v2121
    %v2330 = vpop.permute.xlu0 %2329
    %2333 = vset.pattern.permute.xlu0 1
    %2334 = vperm.xlu0 %2333, %v2122
    %v2335 = vpop.permute.xlu0 %2334
    %2338 = vset.pattern.permute.xlu0 1
    %2339 = vperm.xlu0 %2338, %v2123
    %v2340 = vpop.permute.xlu0 %2339
    %2343 = vset.pattern.permute.xlu0 1
    %2344 = vperm.xlu0 %2343, %v2124
    %v2345 = vpop.permute.xlu0 %2344
    %2348 = vset.pattern.permute.xlu0 1
    %2349 = vperm.xlu0 %2348, %v2125
    %v2350 = vpop.permute.xlu0 %2349
    %2353 = vset.pattern.permute.xlu0 1
    %2354 = vperm.xlu0 %2353, %v2126
    %v2355 = vpop.permute.xlu0 %2354
    %2358 = vset.pattern.permute.xlu0 1
    %2359 = vperm.xlu0 %2358, %v2127
    %v2360 = vpop.permute.xlu0 %2359
    %2363 = vset.pattern.permute.xlu0 1
    %2364 = vperm.xlu0 %2363, %v2128
    %v2365 = vpop.permute.xlu0 %2364
    %2368 = vset.pattern.permute.xlu0 1
    %2369 = vperm.xlu0 %2368, %v2129
    %v2370 = vpop.permute.xlu0 %2369
    %2373 = vset.pattern.permute.xlu0 1
    %2374 = vperm.xlu0 %2373, %v2130
    %v2375 = vpop.permute.xlu0 %2374
    %2378 = vset.pattern.permute.xlu0 1
    %2379 = vperm.xlu0 %2378, %v2131
    %v2380 = vpop.permute.xlu0 %2379
    %2383 = vset.pattern.permute.xlu0 1
    %2384 = vperm.xlu0 %2383, %v2132
    %v2385 = vpop.permute.xlu0 %2384
    %2388 = vset.pattern.permute.xlu0 1
    %2389 = vperm.xlu0 %2388, %v2133
    %v2390 = vpop.permute.xlu0 %2389
    %2393 = vset.pattern.permute.xlu0 1
    %2394 = vperm.xlu0 %2393, %v2134
    %v2395 = vpop.permute.xlu0 %2394
    %2398 = vset.pattern.permute.xlu0 1
    %2399 = vperm.xlu0 %2398, %v2135
    %v2400 = vpop.permute.xlu0 %2399
    %2403 = vset.pattern.permute.xlu0 1
    %2404 = vperm.xlu0 %2403, %v2136
    %v2405 = vpop.permute.xlu0 %2404
    %2408 = vset.pattern.permute.xlu0 1
    %2409 = vperm.xlu0 %2408, %v2137
    %v2410 = vpop.permute.xlu0 %2409
    %2413 = vset.pattern.permute.xlu0 1
    %2414 = vperm.xlu0 %2413, %v2138
    %v2415 = vpop.permute.xlu0 %2414
    %2418 = vset.pattern.permute.xlu0 1
    %2419 = vperm.xlu0 %2418, %v2139
    %v2420 = vpop.permute.xlu0 %2419
    %2423 = vset.pattern.permute.xlu0 1
    %2424 = vperm.xlu0 %2423, %v2140
    %v2425 = vpop.permute.xlu0 %2424
    %v2427 = vadd.f32 %v2273, %v2320
    %v2428 = vadd.f32 %v2274, %v2320
    %v2429 = vadd.f32 %v2275, %v2325
    %v2430 = vadd.f32 %v2276, %v2325
    %v2431 = vadd.f32 %v2277, %v2330
    %v2432 = vadd.f32 %v2278, %v2330
    %v2433 = vadd.f32 %v2279, %v2335
    %v2434 = vadd.f32 %v2280, %v2335
    %v2435 = vadd.f32 %v2281, %v2340
    %v2436 = vadd.f32 %v2282, %v2340
    %v2437 = vadd.f32 %v2283, %v2345
    %v2438 = vadd.f32 %v2284, %v2345
    %v2439 = vadd.f32 %v2285, %v2350
    %v2440 = vadd.f32 %v2286, %v2350
    %v2441 = vadd.f32 %v2287, %v2355
    %v2442 = vadd.f32 %v2288, %v2355
    %v2443 = vadd.f32 %v2289, %v2360
    %v2444 = vadd.f32 %v2290, %v2360
    %v2445 = vadd.f32 %v2291, %v2365
    %v2446 = vadd.f32 %v2292, %v2365
    %v2447 = vadd.f32 %v2293, %v2370
    %v2448 = vadd.f32 %v2294, %v2370
    %v2449 = vadd.f32 %v2295, %v2375
    %v2450 = vadd.f32 %v2296, %v2375
    %v2451 = vadd.f32 %v2297, %v2380
    %v2452 = vadd.f32 %v2298, %v2380
    %v2453 = vadd.f32 %v2299, %v2385
    %v2454 = vadd.f32 %v2300, %v2385
    %v2455 = vadd.f32 %v2301, %v2390
    %v2456 = vadd.f32 %v2302, %v2390
    %v2457 = vadd.f32 %v2303, %v2395
    %v2458 = vadd.f32 %v2304, %v2395
    %v2459 = vadd.f32 %v2305, %v2400
    %v2460 = vadd.f32 %v2306, %v2400
    %v2461 = vadd.f32 %v2307, %v2405
    %v2462 = vadd.f32 %v2308, %v2405
    %v2463 = vadd.f32 %v2309, %v2410
    %v2464 = vadd.f32 %v2310, %v2410
    %v2465 = vadd.f32 %v2311, %v2415
    %v2466 = vadd.f32 %v2312, %v2415
    %v2467 = vadd.f32 %v2313, %v2420
    %v2468 = vadd.f32 %v2314, %v2420
    %v2469 = vadd.f32 %v2315, %v2425
    %v2470 = vadd.f32 %v2316, %v2425
    %2471 = vst [vmem:[#allocation2] sm:$0xff] %v2427
    %2472 = vst.msk [vmem:[#allocation2 + $0x8] sm:$0xff] %vm1766, %v2428
    %2473 = vst [vmem:[#allocation2 + $0x10] sm:$0xff] %v2429
    %2474 = vst.msk [vmem:[#allocation2 + $0x18] sm:$0xff] %vm1766, %v2430
    %2475 = vst [vmem:[#allocation2 + $0x20] sm:$0xff] %v2431
    %2476 = vst.msk [vmem:[#allocation2 + $0x28] sm:$0xff] %vm1766, %v2432
    %2477 = vst [vmem:[#allocation2 + $0x30] sm:$0xff] %v2433
    %2478 = vst.msk [vmem:[#allocation2 + $0x38] sm:$0xff] %vm1766, %v2434
    %2479 = vst [vmem:[#allocation2 + $0x40] sm:$0xff] %v2435
    %2480 = vst.msk [vmem:[#allocation2 + $0x48] sm:$0xff] %vm1766, %v2436
    %2481 = vst [vmem:[#allocation2 + $0x50] sm:$0xff] %v2437
    %2482 = vst.msk [vmem:[#allocation2 + $0x58] sm:$0xff] %vm1766, %v2438
    %2483 = vst [vmem:[#allocation2 + $0x60] sm:$0xff] %v2439
    %2484 = vst.msk [vmem:[#allocation2 + $0x68] sm:$0xff] %vm1766, %v2440
    %2485 = vst [vmem:[#allocation2 + $0x70] sm:$0xff] %v2441
    %2486 = vst.msk [vmem:[#allocation2 + $0x78] sm:$0xff] %vm1766, %v2442
    %2487 = vst [vmem:[#allocation2 + $0x80] sm:$0xff] %v2443
    %2488 = vst.msk [vmem:[#allocation2 + $0x88] sm:$0xff] %vm1766, %v2444
    %2489 = vst [vmem:[#allocation2 + $0x90] sm:$0xff] %v2445
    %2490 = vst.msk [vmem:[#allocation2 + $0x98] sm:$0xff] %vm1766, %v2446
    %2491 = vst [vmem:[#allocation2 + $0xa0] sm:$0xff] %v2447
    %2492 = vst.msk [vmem:[#allocation2 + $0xa8] sm:$0xff] %vm1766, %v2448
    %2493 = vst [vmem:[#allocation2 + $0xb0] sm:$0xff] %v2449
    %2494 = vst.msk [vmem:[#allocation2 + $0xb8] sm:$0xff] %vm1766, %v2450
    %2495 = vst [vmem:[#allocation2 + $0xc0] sm:$0xff] %v2451
    %2496 = vst.msk [vmem:[#allocation2 + $0xc8] sm:$0xff] %vm1766, %v2452
    %2497 = vst [vmem:[#allocation2 + $0xd0] sm:$0xff] %v2453
    %2498 = vst.msk [vmem:[#allocation2 + $0xd8] sm:$0xff] %vm1766, %v2454
    %2499 = vst [vmem:[#allocation2 + $0xe0] sm:$0xff] %v2455
    %2500 = vst.msk [vmem:[#allocation2 + $0xe8] sm:$0xff] %vm1766, %v2456
    %2501 = vst [vmem:[#allocation2 + $0xf0] sm:$0xff] %v2457
    %2502 = vst.msk [vmem:[#allocation2 + $0xf8] sm:$0xff] %vm1766, %v2458
    %2503 = vst [vmem:[#allocation2 + $0x100] sm:$0xff] %v2459
    %2504 = vst.msk [vmem:[#allocation2 + $0x108] sm:$0xff] %vm1766, %v2460
    %2505 = vst [vmem:[#allocation2 + $0x110] sm:$0xff] %v2461
    %2506 = vst.msk [vmem:[#allocation2 + $0x118] sm:$0xff] %vm1766, %v2462
    %2507 = vst [vmem:[#allocation2 + $0x120] sm:$0xff] %v2463
    %2508 = vst.msk [vmem:[#allocation2 + $0x128] sm:$0xff] %vm1766, %v2464
    %2509 = vst [vmem:[#allocation2 + $0x130] sm:$0xff] %v2465
    %2510 = vst.msk [vmem:[#allocation2 + $0x138] sm:$0xff] %vm1766, %v2466
    %2511 = vst [vmem:[#allocation2 + $0x140] sm:$0xff] %v2467
    %2512 = vst.msk [vmem:[#allocation2 + $0x148] sm:$0xff] %vm1766, %v2468
    %2513 = vst [vmem:[#allocation2 + $0x150] sm:$0xff] %v2469
    %2514 = vst.msk [vmem:[#allocation2 + $0x158] sm:$0xff] %vm1766, %v2470
    // Predicated region
    $region14: #{tpu_custom_call.1} parent=1 // pred_check
      _
    $region15: #{tpu_custom_call.1} parent=1 // pred_check_branch
      %2516 = sbr.rel (0) target = $region17
    $region16: #{tpu_custom_call.1} parent=1 // pred_region
      %s2518 = ssub.s32 5632, 5632
      %2519 = vsyncadd [#allocation3], %s2518
      %s2520 = sshll.u32 [#allocation2], 4
      %s2521 = int_to_ptr.vmem [resolvable:$true] %s2520
      %2526 = dma.vmem_to_hbm [thread:$0]  %s2521, 5632, %s3, [#allocation3], 256, 256, 16
    $region17: #{tpu_custom_call.1} parent=1 // pred_fallthru
      _
    // Predicated region
    $region18: #{tpu_custom_call.1} parent=1 // pred_check
      _
    $region19: #{tpu_custom_call.1} parent=1 // pred_check_branch
      %2528 = sbr.rel (0) target = $region21
    $region20: #{tpu_custom_call.1} parent=1 // pred_region
      %2529 = dma.done [#allocation3], 5632
    $region21: #{tpu_custom_call.1} parent=1 // pred_fallthru
      _
    %2530 = vsyncpa [#allocation3], 1

</llo_original>
